<compile_context>
chip_gen: v5e
topology: v5e:2x2
jax: 0.10.0
libtpu: 0.0.40
codegen_flags: <defaults>
</compile_context>

<pallas_src>
import math
from functools import partial

import jax
import jax.numpy as jnp
from jax.experimental import pallas as pl
from jax.experimental.pallas import tpu as pltpu


# ----------------------------------------------------------------------------
# Fused kernel: the whole encoder stack (all layers) for one batch block.
# ----------------------------------------------------------------------------
def fused_encoder_stack_kernel(x_ref, wqkv_ref, wp_ref, gamma_ref, beta_ref,
                               w1_ref, b1_ref, w2_ref, b2_ref,
                               o_ref, x_vmem, *, n_heads):
    l = pl.program_id(1)

    # Layer 0: pull this batch block's activations into the VMEM carry.
    @pl.when(l == 0)
    def _():
        x_vmem[...] = x_ref[...]

    bb, t, d = x_vmem.shape
    h = n_heads
    dh = d // h
    scale = 1.0 / math.sqrt(float(d) / float(h))   # module: scores / sqrt(d_model / h)

    # Hoist all per-layer parameter reads (read once, reuse; no re-broadcasts).
    wqkv = wqkv_ref[0]        # (3H, D, dh)  ==  [q-heads | k-heads | v-heads]
    wp_h = wp_ref[0]          # (H, dh, D)
    gamma = gamma_ref[0]      # (1, D)
    beta = beta_ref[0]        # (1, D)
    w1 = w1_ref[0]            # (D, DFF)
    b1 = b1_ref[0]            # (1, DFF)
    w2 = w2_ref[0]            # (DFF, D)
    b2 = b2_ref[0]            # (1, D)

    x = x_vmem[...]           # (Bb, T, D)

    # ---- Multi-head attention (head-batched; no lane-axis head slicing) ----
    rows = []
    for b in range(bb):                                   # small static unroll
        xb = x[b]                                         # (T, D)
        xb_bcast = jnp.broadcast_to(xb[None, :, :], (3 * h, t, d))
        # Fused QKV projection as one batched matmul over 3H "head" slots.
        qkv = jnp.einsum('ntd,ndk->ntk', xb_bcast, wqkv,
                         preferred_element_type=jnp.float32)      # (3H, T, dh)
        q, k, v = qkv[:h], qkv[h:2 * h], qkv[2 * h:]
        s = jnp.einsum('hqd,hkd->hqk', q, k,
                       preferred_element_type=jnp.float32) * scale
        s = s - jnp.max(s, axis=-1, keepdims=True)                # stable softmax
        p = jnp.exp(s)
        p = p * pl.reciprocal(jnp.sum(p, axis=-1, keepdims=True), approx=True)
        ctx = jnp.einsum('hqk,hkd->hqd', p, v,
                         preferred_element_type=jnp.float32)      # (H, T, dh)
        # concat(heads) @ Wp  ==  sum_h head_h @ Wp[h*dh:(h+1)*dh, :]
        mha_b = jnp.einsum('hqd,hdm->hqm', ctx, wp_h,
                           preferred_element_type=jnp.float32).sum(axis=0)
        rows.append(xb + mha_b)                            # residual, (T, D)

    y = jnp.concatenate(rows, axis=0)                      # (Bb*T, D) flat slab

    # ---- residual + LayerNorm (module reuses ONE nn.LayerNorm twice) -------
    def layer_norm(z):
        mean = jnp.mean(z, axis=-1, keepdims=True)
        var = jnp.mean(jnp.square(z - mean), axis=-1, keepdims=True)
        return (z - mean) * jax.lax.rsqrt(var + 1e-5) * gamma + beta

    y = layer_norm(y)

    # ---- Linear -> ReLU -> Linear (full-width MXU matmuls on (Bb*T, D)) ----
    h1 = jnp.maximum(jnp.dot(y, w1, preferred_element_type=jnp.float32) + b1, 0.0)
    ff = jnp.dot(h1, w2, preferred_element_type=jnp.float32) + b2

    # ---- residual + LayerNorm (same LayerNorm params, as in the module) ----
    out = layer_norm(y + ff).reshape(bb, t, d)

    x_vmem[...] = out          # carry to the next layer
    o_ref[...] = out           # output block resident across l; HBM writeback at end


# ----------------------------------------------------------------------------
# Wrapper: BlockSpecs, grid, compiler params.
# ----------------------------------------------------------------------------
def _layer_param_spec(arr):
    """Block over the leading layer axis; whole weight slab per grid step."""
    rank = arr.ndim
    return pl.BlockSpec((1,) + tuple(arr.shape[1:]),
                        lambda b, l, _r=rank: (l,) + (0,) * (_r - 1))


def encoder_stack_pallas(x, stacked, n_heads, *, block_b=None,
                         vmem_limit_bytes=48 * 1024 * 1024):
    B, T, D = x.shape
    L = stacked["wqkv"].shape[0]
    if block_b is None:
        block_b = B
    assert B % block_b == 0

    kernel = partial(fused_encoder_stack_kernel, n_heads=n_heads)

    act_spec = pl.BlockSpec((block_b, T, D), lambda b, l: (b, 0, 0))
    w_names = ("wqkv", "wp", "gamma", "beta", "w1", "b1", "w2", "b2")
    in_specs = [act_spec] + [_layer_param_spec(stacked[nm]) for nm in w_names]

    return pl.pallas_call(
        kernel,
        out_shape=jax.ShapeDtypeStruct((B, T, D), jnp.float32),
        grid=(B // block_b, L),
        in_specs=in_specs,
        out_specs=act_spec,
        scratch_shapes=[pltpu.VMEM((block_b, T, D), jnp.float32)],
        compiler_params=pltpu.CompilerParams(
            dimension_semantics=("parallel", "arbitrary"),
            vmem_limit_bytes=vmem_limit_bytes),
    )(x, *[stacked[nm] for nm in w_names])


# ----------------------------------------------------------------------------
# Host-side parameter plumbing (pure JAX glue, no compute hoisted).
# ----------------------------------------------------------------------------
def stack_layer_params(layer_params, n_heads):
    """Rearrange per-layer params into L-stacked, head-major weight slabs."""
    H = n_heads

    def one(p):
        D = p["wq"].shape[0]
        dh = D // H

        def heads(w):                        # (D, D) -> (H, D, dh)
            return w.reshape(D, H, dh).transpose(1, 0, 2)

        wqkv = jnp.concatenate([heads(p["wq"]), heads(p["wk"]), heads(p["wv"])],
                               axis=0)       # (3H, D, dh)
        wp_h = p["wp"].reshape(H, dh, D)     # row-block h == head h
        return dict(wqkv=wqkv, wp=wp_h, gamma=p["gamma"], beta=p["beta"],
                    w1=p["w1"], b1=p["b1"], w2=p["w2"], b2=p["b2"])

    per = [one(p) for p in layer_params]
    return {k: jnp.stack([q[k] for q in per], axis=0) for k in per[0]}


def make_pos_embeddings(max_tokens, d_model):
    """Reproduces First_Encoder.custom / pos_embeddings exactly."""
    pos = jnp.arange(max_tokens, dtype=jnp.float32)
    rows = []
    for idx in range(d_model):
        if idx % 2 == 0:
            const = 10000.0 ** (idx / d_model)
            rows.append(jnp.sin(pos / const))
        else:
            const = 10000.0 ** ((idx - 1) / d_model)
            rows.append(jnp.cos(pos / const))
    return jnp.stack(rows).T                 # (T, D)


def init_layer_params(key, d_model, d_ff, scale=0.1):
    ks = jax.random.split(key, 8)
    return dict(
        wq=jax.random.normal(ks[0], (d_model, d_model), jnp.float32) * scale,
        wk=jax.random.normal(ks[1], (d_model, d_model), jnp.float32) * scale,
        wv=jax.random.normal(ks[2], (d_model, d_model), jnp.float32) * scale,
        wp=jax.random.normal(ks[3], (d_model, d_model), jnp.float32) * scale,
        gamma=jnp.ones((1, d_model), jnp.float32),
        beta=jnp.zeros((1, d_model), jnp.float32),
        w1=jax.random.normal(ks[4], (d_model, d_ff), jnp.float32) * scale,
        b1=jax.random.normal(ks[5], (1, d_ff), jnp.float32) * scale,
        w2=jax.random.normal(ks[6], (d_ff, d_model), jnp.float32) * scale,
        b2=jax.random.normal(ks[7], (1, d_model), jnp.float32) * scale,
    )


# ----------------------------------------------------------------------------
# Pure-JAX reference (mirrors the PyTorch module's forward exactly).
# ----------------------------------------------------------------------------
def _reference_layer(x, p, n_heads):
    B, T, D = x.shape
    dh = D // n_heads
    q = (x @ p["wq"]).reshape(B, T, n_heads, dh).transpose(0, 2, 1, 3)
    k = (x @ p["wk"]).reshape(B, T, n_heads, dh).transpose(0, 2, 1, 3)
    v = (x @ p["wv"]).reshape(B, T, n_heads, dh).transpose(0, 2, 1, 3)
    s = (q @ jnp.swapaxes(k, -1, -2)) / math.sqrt(D / n_heads)
    a = jax.nn.softmax(s, axis=-1)
    ctx = (a @ v).transpose(0, 2, 1, 3).reshape(B, T, D)
    mha = ctx @ p["wp"]

    def ln(z):
        m = jnp.mean(z, axis=-1, keepdims=True)
        va = jnp.mean((z - m) ** 2, axis=-1, keepdims=True)
        return (z - m) / jnp.sqrt(va + 1e-5) * p["gamma"] + p["beta"]

    x = ln(x + mha)
    ff = jnp.maximum(x @ p["w1"] + p["b1"], 0.0) @ p["w2"] + p["b2"]
    return ln(x + ff)


def encoder_stack_reference(x, layer_params, n_heads):
    for p in layer_params:
        x = _reference_layer(x, p, n_heads)
    return x


# ----------------------------------------------------------------------------
if __name__ == "__main__":
    # Small synthetic, lane-aligned shapes (original: T=200, D=512, DFF=2048,
    # vocab=202).  D=128 keeps the output block lane-dense; T=8 is sublane-aligned.
    B, T, D, H, DFF = 2, 8, 128, 4, 256
    N = 2               # N_Encoder layers; total layers = N + 1 (First_Encoder)
    VOCAB = 202

    key = jax.random.PRNGKey(0)
    k_emb, k_tok, *layer_keys = jax.random.split(key, 2 + (N + 1))

    emb_table = jax.random.normal(k_emb, (VOCAB, D), jnp.float32) * 0.1
    tokens = jax.random.randint(k_tok, (B, T), 0, VOCAB, dtype=jnp.int32)
    pos_emb = make_pos_embeddings(T, D)
    layer_params = [init_layer_params(layer_keys[i], D, DFF) for i in range(N + 1)]

    # glue: embedding lookup + positional embedding add (First_Encoder prologue)
    x0 = emb_table[tokens] + pos_emb[None, :, :]

    stacked = stack_layer_params(layer_params, H)
    out = encoder_stack_pallas(x0, stacked, H)
    out = jax.block_until_ready(out)

    ref = encoder_stack_reference(x0, layer_params, H)

    assert out.shape == (B, T, D)
    assert bool(jnp.all(jnp.isfinite(out)))
    # approx reciprocal in the in-kernel softmax => loose (but meaningful) tolerance.
    assert bool(jnp.allclose(out, ref, atol=3e-2, rtol=3e-2)), \
        float(jnp.max(jnp.abs(out - ref)))
    print("KERNEL_OK")
</pallas_src>

<mosaic_0001>
module attributes {stable_mosaic.version = 11 : i64} {
  func.func @fused_encoder_stack_kernel(%arg0: i32, %arg1: i32, %arg2: memref<2x8x128xf32, #tpu.memory_space<vmem>>, %arg3: memref<1x12x128x32xf32, #tpu.memory_space<vmem>>, %arg4: memref<1x4x32x128xf32, #tpu.memory_space<vmem>>, %arg5: memref<1x1x128xf32, #tpu.memory_space<vmem>>, %arg6: memref<1x1x128xf32, #tpu.memory_space<vmem>>, %arg7: memref<1x128x256xf32, #tpu.memory_space<vmem>>, %arg8: memref<1x1x256xf32, #tpu.memory_space<vmem>>, %arg9: memref<1x256x128xf32, #tpu.memory_space<vmem>>, %arg10: memref<1x1x128xf32, #tpu.memory_space<vmem>>, %arg11: memref<2x8x128xf32, #tpu.memory_space<vmem>>, %arg12: memref<2x8x128xf32, #tpu.memory_space<vmem>>) attributes {dimension_semantics = [#tpu.dimension_semantics<parallel>, #tpu.dimension_semantics<arbitrary>], iteration_bounds = array<i64: 1, 3>, scalar_prefetch = 0 : i64, scratch_operands = 1 : i64, tpu.core_type = #tpu.core_type<tc>, window_params = [{transform_indices = @transform_0, window_bounds = array<i64: 2, 8, 128>}, {transform_indices = @transform_1, window_bounds = array<i64: 1, 12, 128, 32>}, {transform_indices = @transform_2, window_bounds = array<i64: 1, 4, 32, 128>}, {transform_indices = @transform_3, window_bounds = array<i64: 1, 1, 128>}, {transform_indices = @transform_4, window_bounds = array<i64: 1, 1, 128>}, {transform_indices = @transform_5, window_bounds = array<i64: 1, 128, 256>}, {transform_indices = @transform_6, window_bounds = array<i64: 1, 1, 256>}, {transform_indices = @transform_7, window_bounds = array<i64: 1, 256, 128>}, {transform_indices = @transform_8, window_bounds = array<i64: 1, 1, 128>}, {transform_indices = @transform_9, window_bounds = array<i64: 2, 8, 128>}]} {
    %c0_i32 = arith.constant 0 : i32
    %0 = arith.cmpi eq, %arg1, %c0_i32 : i32
    %1 = arith.extui %0 : i1 to i32
    %c0_i32_0 = arith.constant 0 : i32
    %2 = arith.cmpi ne, %1, %c0_i32_0 : i32
    scf.if %2 {
      %c0_63 = arith.constant 0 : index
      %c0_64 = arith.constant 0 : index
      %c0_65 = arith.constant 0 : index
      %129 = vector.load %arg2[%c0_63, %c0_64, %c0_65] : memref<2x8x128xf32, #tpu.memory_space<vmem>>, vector<2x8x128xf32>
      %c0_66 = arith.constant 0 : index
      %c0_67 = arith.constant 0 : index
      %c0_68 = arith.constant 0 : index
      %130 = vector.load %arg12[%c0_66, %c0_67, %c0_68] : memref<2x8x128xf32, #tpu.memory_space<vmem>>, vector<2x8x128xf32>
      tpu.vector_store %arg12[%c0_66, %c0_67, %c0_68], %129 {strides = array<i32>} : memref<2x8x128xf32, #tpu.memory_space<vmem>>, vector<2x8x128xf32>,
    } else {
    }
    %c0 = arith.constant 0 : index
    %c0_1 = arith.constant 0 : index
    %c0_2 = arith.constant 0 : index
    %c0_3 = arith.constant 0 : index
    %3 = vector.load %arg3[%c0, %c0_1, %c0_2, %c0_3] : memref<1x12x128x32xf32, #tpu.memory_space<vmem>>, vector<1x12x128x32xf32>
    %4 = vector.shape_cast %3 : vector<1x12x128x32xf32> to vector<12x128x32xf32>
    %c0_4 = arith.constant 0 : index
    %c0_5 = arith.constant 0 : index
    %c0_6 = arith.constant 0 : index
    %c0_7 = arith.constant 0 : index
    %5 = vector.load %arg4[%c0_4, %c0_5, %c0_6, %c0_7] : memref<1x4x32x128xf32, #tpu.memory_space<vmem>>, vector<1x4x32x128xf32>
    %6 = vector.shape_cast %5 : vector<1x4x32x128xf32> to vector<4x32x128xf32>
    %c0_8 = arith.constant 0 : index
    %c0_9 = arith.constant 0 : index
    %c0_10 = arith.constant 0 : index
    %7 = vector.load %arg5[%c0_8, %c0_9, %c0_10] : memref<1x1x128xf32, #tpu.memory_space<vmem>>, vector<1x1x128xf32>
    %8 = vector.shape_cast %7 : vector<1x1x128xf32> to vector<1x128xf32>
    %c0_11 = arith.constant 0 : index
    %c0_12 = arith.constant 0 : index
    %c0_13 = arith.constant 0 : index
    %9 = vector.load %arg6[%c0_11, %c0_12, %c0_13] : memref<1x1x128xf32, #tpu.memory_space<vmem>>, vector<1x1x128xf32>
    %10 = vector.shape_cast %9 : vector<1x1x128xf32> to vector<1x128xf32>
    %c0_14 = arith.constant 0 : index
    %c0_15 = arith.constant 0 : index
    %c0_16 = arith.constant 0 : index
    %11 = vector.load %arg7[%c0_14, %c0_15, %c0_16] : memref<1x128x256xf32, #tpu.memory_space<vmem>>, vector<1x128x256xf32>
    %12 = vector.shape_cast %11 : vector<1x128x256xf32> to vector<128x256xf32>
    %c0_17 = arith.constant 0 : index
    %c0_18 = arith.constant 0 : index
    %c0_19 = arith.constant 0 : index
    %13 = vector.load %arg8[%c0_17, %c0_18, %c0_19] : memref<1x1x256xf32, #tpu.memory_space<vmem>>, vector<1x1x256xf32>
    %14 = vector.shape_cast %13 : vector<1x1x256xf32> to vector<1x256xf32>
    %c0_20 = arith.constant 0 : index
    %c0_21 = arith.constant 0 : index
    %c0_22 = arith.constant 0 : index
    %15 = vector.load %arg9[%c0_20, %c0_21, %c0_22] : memref<1x256x128xf32, #tpu.memory_space<vmem>>, vector<1x256x128xf32>
    %16 = vector.shape_cast %15 : vector<1x256x128xf32> to vector<256x128xf32>
    %c0_23 = arith.constant 0 : index
    %c0_24 = arith.constant 0 : index
    %c0_25 = arith.constant 0 : index
    %17 = vector.load %arg10[%c0_23, %c0_24, %c0_25] : memref<1x1x128xf32, #tpu.memory_space<vmem>>, vector<1x1x128xf32>
    %18 = vector.shape_cast %17 : vector<1x1x128xf32> to vector<1x128xf32>
    %c0_26 = arith.constant 0 : index
    %c0_27 = arith.constant 0 : index
    %c0_28 = arith.constant 0 : index
    %19 = vector.load %arg12[%c0_26, %c0_27, %c0_28] : memref<2x8x128xf32, #tpu.memory_space<vmem>>, vector<2x8x128xf32>
    %20 = vector.extract_strided_slice %19 {offsets = [0, 0, 0], sizes = [1, 8, 128], strides = [1, 1, 1]} : vector<2x8x128xf32> to vector<1x8x128xf32>
    %21 = vector.shape_cast %20 : vector<1x8x128xf32> to vector<8x128xf32>
    %22 = vector.shape_cast %21 : vector<8x128xf32> to vector<1x8x128xf32>
    %23 = vector.shape_cast %22 : vector<1x8x128xf32> to vector<1x8x128xf32>
    %24 = vector.broadcast %23 : vector<1x8x128xf32> to vector<12x8x128xf32>
    "tpu.trace_start"() <{level = 10 : i32, message = "ntd,ndk->ntk"}> : () -> ()
    %cst = arith.constant dense<0.000000e+00> : vector<12x8x32xf32>
    %25 = tpu.matmul %24, %4, %cst {dimension_numbers = #tpu.dot_dimension_numbers<[2], [1], [1], [2], [0, 0, 0, 1, 1, 2], [0], [0]>} : vector<12x8x128xf32>, vector<12x128x32xf32>, vector<12x8x32xf32> -> vector<12x8x32xf32>
    "tpu.trace_stop"() : () -> ()
    %26 = vector.extract_strided_slice %25 {offsets = [0, 0, 0], sizes = [4, 8, 32], strides = [1, 1, 1]} : vector<12x8x32xf32> to vector<4x8x32xf32>
    %27 = vector.extract_strided_slice %25 {offsets = [4, 0, 0], sizes = [4, 8, 32], strides = [1, 1, 1]} : vector<12x8x32xf32> to vector<4x8x32xf32>
    %28 = vector.extract_strided_slice %25 {offsets = [8, 0, 0], sizes = [4, 8, 32], strides = [1, 1, 1]} : vector<12x8x32xf32> to vector<4x8x32xf32>
    "tpu.trace_start"() <{level = 10 : i32, message = "hqd,hkd->hqk"}> : () -> ()
    %cst_29 = arith.constant dense<0.000000e+00> : vector<4x8x8xf32>
    %29 = tpu.matmul %26, %27, %cst_29 {dimension_numbers = #tpu.dot_dimension_numbers<[2], [2], [1], [1], [0, 0, 0, 1, 1, 1], [0], [0]>} : vector<4x8x32xf32>, vector<4x8x32xf32>, vector<4x8x8xf32> -> vector<4x8x8xf32>
    "tpu.trace_stop"() : () -> ()
    %cst_30 = arith.constant 0.176776692 : f32
    %30 = vector.broadcast %cst_30 : f32 to vector<4x8x8xf32>
    %31 = arith.mulf %29, %30 : vector<4x8x8xf32>
    %cst_31 = arith.constant dense<0xFF800000> : vector<4x8xf32>
    %32 = vector.multi_reduction <maximumf>, %31, %cst_31 [2] : vector<4x8x8xf32> to vector<4x8xf32>
    %33 = vector.shape_cast %32 : vector<4x8xf32> to vector<4x8x1xf32>
    %34 = vector.broadcast %33 : vector<4x8x1xf32> to vector<4x8x8xf32>
    %35 = arith.subf %31, %34 : vector<4x8x8xf32>
    %36 = math.exp %35 : vector<4x8x8xf32>
    %cst_32 = arith.constant dense<0.000000e+00> : vector<4x8xf32>
    %37 = vector.multi_reduction <add>, %36, %cst_32 [2] : vector<4x8x8xf32> to vector<4x8xf32>
    %38 = vector.shape_cast %37 : vector<4x8xf32> to vector<4x8x1xf32>
    %39 = tpu.reciprocal %38 {approx = true} : vector<4x8x1xf32> -> vector<4x8x1xf32>
    %40 = vector.broadcast %39 : vector<4x8x1xf32> to vector<4x8x8xf32>
    %41 = arith.mulf %36, %40 : vector<4x8x8xf32>
    "tpu.trace_start"() <{level = 10 : i32, message = "hqk,hkd->hqd"}> : () -> ()
    %cst_33 = arith.constant dense<0.000000e+00> : vector<4x8x32xf32>
    %42 = tpu.matmul %41, %28, %cst_33 {dimension_numbers = #tpu.dot_dimension_numbers<[2], [1], [1], [2], [0, 0, 0, 1, 1, 2], [0], [0]>} : vector<4x8x8xf32>, vector<4x8x32xf32>, vector<4x8x32xf32> -> vector<4x8x32xf32>
    "tpu.trace_stop"() : () -> ()
    "tpu.trace_start"() <{level = 10 : i32, message = "hqd,hdm->hqm"}> : () -> ()
    %cst_34 = arith.constant dense<0.000000e+00> : vector<4x8x128xf32>
    %43 = tpu.matmul %42, %6, %cst_34 {dimension_numbers = #tpu.dot_dimension_numbers<[2], [1], [1], [2], [0, 0, 0, 1, 1, 2], [0], [0]>} : vector<4x8x32xf32>, vector<4x32x128xf32>, vector<4x8x128xf32> -> vector<4x8x128xf32>
    "tpu.trace_stop"() : () -> ()
    %cst_35 = arith.constant dense<0.000000e+00> : vector<8x128xf32>
    %44 = vector.multi_reduction <add>, %43, %cst_35 [0] : vector<4x8x128xf32> to vector<8x128xf32>
    %45 = arith.addf %21, %44 : vector<8x128xf32>
    %46 = vector.extract_strided_slice %19 {offsets = [1, 0, 0], sizes = [1, 8, 128], strides = [1, 1, 1]} : vector<2x8x128xf32> to vector<1x8x128xf32>
    %47 = vector.shape_cast %46 : vector<1x8x128xf32> to vector<8x128xf32>
    %48 = vector.shape_cast %47 : vector<8x128xf32> to vector<1x8x128xf32>
    %49 = vector.shape_cast %48 : vector<1x8x128xf32> to vector<1x8x128xf32>
    %50 = vector.broadcast %49 : vector<1x8x128xf32> to vector<12x8x128xf32>
    "tpu.trace_start"() <{level = 10 : i32, message = "ntd,ndk->ntk"}> : () -> ()
    %cst_36 = arith.constant dense<0.000000e+00> : vector<12x8x32xf32>
    %51 = tpu.matmul %50, %4, %cst_36 {dimension_numbers = #tpu.dot_dimension_numbers<[2], [1], [1], [2], [0, 0, 0, 1, 1, 2], [0], [0]>} : vector<12x8x128xf32>, vector<12x128x32xf32>, vector<12x8x32xf32> -> vector<12x8x32xf32>
    "tpu.trace_stop"() : () -> ()
    %52 = vector.extract_strided_slice %51 {offsets = [0, 0, 0], sizes = [4, 8, 32], strides = [1, 1, 1]} : vector<12x8x32xf32> to vector<4x8x32xf32>
    %53 = vector.extract_strided_slice %51 {offsets = [4, 0, 0], sizes = [4, 8, 32], strides = [1, 1, 1]} : vector<12x8x32xf32> to vector<4x8x32xf32>
    %54 = vector.extract_strided_slice %51 {offsets = [8, 0, 0], sizes = [4, 8, 32], strides = [1, 1, 1]} : vector<12x8x32xf32> to vector<4x8x32xf32>
    "tpu.trace_start"() <{level = 10 : i32, message = "hqd,hkd->hqk"}> : () -> ()
    %cst_37 = arith.constant dense<0.000000e+00> : vector<4x8x8xf32>
    %55 = tpu.matmul %52, %53, %cst_37 {dimension_numbers = #tpu.dot_dimension_numbers<[2], [2], [1], [1], [0, 0, 0, 1, 1, 1], [0], [0]>} : vector<4x8x32xf32>, vector<4x8x32xf32>, vector<4x8x8xf32> -> vector<4x8x8xf32>
    "tpu.trace_stop"() : () -> ()
    %cst_38 = arith.constant 0.176776692 : f32
    %56 = vector.broadcast %cst_38 : f32 to vector<4x8x8xf32>
    %57 = arith.mulf %55, %56 : vector<4x8x8xf32>
    %cst_39 = arith.constant dense<0xFF800000> : vector<4x8xf32>
    %58 = vector.multi_reduction <maximumf>, %57, %cst_39 [2] : vector<4x8x8xf32> to vector<4x8xf32>
    %59 = vector.shape_cast %58 : vector<4x8xf32> to vector<4x8x1xf32>
    %60 = vector.broadcast %59 : vector<4x8x1xf32> to vector<4x8x8xf32>
    %61 = arith.subf %57, %60 : vector<4x8x8xf32>
    %62 = math.exp %61 : vector<4x8x8xf32>
    %cst_40 = arith.constant dense<0.000000e+00> : vector<4x8xf32>
    %63 = vector.multi_reduction <add>, %62, %cst_40 [2] : vector<4x8x8xf32> to vector<4x8xf32>
    %64 = vector.shape_cast %63 : vector<4x8xf32> to vector<4x8x1xf32>
    %65 = tpu.reciprocal %64 {approx = true} : vector<4x8x1xf32> -> vector<4x8x1xf32>
    %66 = vector.broadcast %65 : vector<4x8x1xf32> to vector<4x8x8xf32>
    %67 = arith.mulf %62, %66 : vector<4x8x8xf32>
    "tpu.trace_start"() <{level = 10 : i32, message = "hqk,hkd->hqd"}> : () -> ()
    %cst_41 = arith.constant dense<0.000000e+00> : vector<4x8x32xf32>
    %68 = tpu.matmul %67, %54, %cst_41 {dimension_numbers = #tpu.dot_dimension_numbers<[2], [1], [1], [2], [0, 0, 0, 1, 1, 2], [0], [0]>} : vector<4x8x8xf32>, vector<4x8x32xf32>, vector<4x8x32xf32> -> vector<4x8x32xf32>
    "tpu.trace_stop"() : () -> ()
    "tpu.trace_start"() <{level = 10 : i32, message = "hqd,hdm->hqm"}> : () -> ()
    %cst_42 = arith.constant dense<0.000000e+00> : vector<4x8x128xf32>
    %69 = tpu.matmul %68, %6, %cst_42 {dimension_numbers = #tpu.dot_dimension_numbers<[2], [1], [1], [2], [0, 0, 0, 1, 1, 2], [0], [0]>} : vector<4x8x32xf32>, vector<4x32x128xf32>, vector<4x8x128xf32> -> vector<4x8x128xf32>
    "tpu.trace_stop"() : () -> ()
    %cst_43 = arith.constant dense<0.000000e+00> : vector<8x128xf32>
    %70 = vector.multi_reduction <add>, %69, %cst_43 [0] : vector<4x8x128xf32> to vector<8x128xf32>
    %71 = arith.addf %47, %70 : vector<8x128xf32>
    %72 = tpu.concatenate %45, %71 in 0 : vector<8x128xf32>, vector<8x128xf32> -> vector<16x128xf32>
    %cst_44 = arith.constant dense<0.000000e+00> : vector<16xf32>
    %73 = vector.multi_reduction <add>, %72, %cst_44 [1] : vector<16x128xf32> to vector<16xf32>
    %74 = vector.shape_cast %73 : vector<16xf32> to vector<16x1xf32>
    %cst_45 = arith.constant 1.280000e+02 : f32
    %75 = vector.broadcast %cst_45 : f32 to vector<16x1xf32>
    %76 = arith.divf %74, %75 : vector<16x1xf32>
    %77 = vector.broadcast %76 : vector<16x1xf32> to vector<16x128xf32>
    %78 = arith.subf %72, %77 : vector<16x128xf32>
    %79 = arith.mulf %78, %78 : vector<16x128xf32>
    %cst_46 = arith.constant dense<0.000000e+00> : vector<16xf32>
    %80 = vector.multi_reduction <add>, %79, %cst_46 [1] : vector<16x128xf32> to vector<16xf32>
    %81 = vector.shape_cast %80 : vector<16xf32> to vector<16x1xf32>
    %cst_47 = arith.constant 1.280000e+02 : f32
    %82 = vector.broadcast %cst_47 : f32 to vector<16x1xf32>
    %83 = arith.divf %81, %82 : vector<16x1xf32>
    %84 = vector.broadcast %76 : vector<16x1xf32> to vector<16x128xf32>
    %85 = arith.subf %72, %84 : vector<16x128xf32>
    %cst_48 = arith.constant 9.99999974E-6 : f32
    %86 = vector.broadcast %cst_48 : f32 to vector<16x1xf32>
    %87 = arith.addf %83, %86 : vector<16x1xf32>
    %88 = math.rsqrt %87 : vector<16x1xf32>
    %89 = vector.broadcast %88 : vector<16x1xf32> to vector<16x128xf32>
    %90 = arith.mulf %85, %89 : vector<16x128xf32>
    %91 = vector.broadcast %8 : vector<1x128xf32> to vector<16x128xf32>
    %92 = arith.mulf %90, %91 : vector<16x128xf32>
    %93 = vector.broadcast %10 : vector<1x128xf32> to vector<16x128xf32>
    %94 = arith.addf %92, %93 : vector<16x128xf32>
    %cst_49 = arith.constant dense<0.000000e+00> : vector<16x256xf32>
    %95 = tpu.matmul %94, %12, %cst_49 {dimension_numbers = #tpu.dot_dimension_numbers<[1], [0], [0], [1], [0, 0, 1, 1], [], []>} : vector<16x128xf32>, vector<128x256xf32>, vector<16x256xf32> -> vector<16x256xf32>
    %96 = vector.broadcast %14 : vector<1x256xf32> to vector<16x256xf32>
    %97 = arith.addf %95, %96 : vector<16x256xf32>
    %cst_50 = arith.constant 0.000000e+00 : f32
    %98 = vector.broadcast %cst_50 : f32 to vector<16x256xf32>
    %99 = arith.maximumf %97, %98 : vector<16x256xf32>
    %cst_51 = arith.constant dense<0.000000e+00> : vector<16x128xf32>
    %100 = tpu.matmul %99, %16, %cst_51 {dimension_numbers = #tpu.dot_dimension_numbers<[1], [0], [0], [1], [0, 0, 1, 1], [], []>} : vector<16x256xf32>, vector<256x128xf32>, vector<16x128xf32> -> vector<16x128xf32>
    %101 = vector.broadcast %18 : vector<1x128xf32> to vector<16x128xf32>
    %102 = arith.addf %100, %101 : vector<16x128xf32>
    %103 = arith.addf %94, %102 : vector<16x128xf32>
    %cst_52 = arith.constant dense<0.000000e+00> : vector<16xf32>
    %104 = vector.multi_reduction <add>, %103, %cst_52 [1] : vector<16x128xf32> to vector<16xf32>
    %105 = vector.shape_cast %104 : vector<16xf32> to vector<16x1xf32>
    %cst_53 = arith.constant 1.280000e+02 : f32
    %106 = vector.broadcast %cst_53 : f32 to vector<16x1xf32>
    %107 = arith.divf %105, %106 : vector<16x1xf32>
    %108 = vector.broadcast %107 : vector<16x1xf32> to vector<16x128xf32>
    %109 = arith.subf %103, %108 : vector<16x128xf32>
    %110 = arith.mulf %109, %109 : vector<16x128xf32>
    %cst_54 = arith.constant dense<0.000000e+00> : vector<16xf32>
    %111 = vector.multi_reduction <add>, %110, %cst_54 [1] : vector<16x128xf32> to vector<16xf32>
    %112 = vector.shape_cast %111 : vector<16xf32> to vector<16x1xf32>
    %cst_55 = arith.constant 1.280000e+02 : f32
    %113 = vector.broadcast %cst_55 : f32 to vector<16x1xf32>
    %114 = arith.divf %112, %113 : vector<16x1xf32>
    %115 = vector.broadcast %107 : vector<16x1xf32> to vector<16x128xf32>
    %116 = arith.subf %103, %115 : vector<16x128xf32>
    %cst_56 = arith.constant 9.99999974E-6 : f32
    %117 = vector.broadcast %cst_56 : f32 to vector<16x1xf32>
    %118 = arith.addf %114, %117 : vector<16x1xf32>
    %119 = math.rsqrt %118 : vector<16x1xf32>
    %120 = vector.broadcast %119 : vector<16x1xf32> to vector<16x128xf32>
    %121 = arith.mulf %116, %120 : vector<16x128xf32>
    %122 = vector.broadcast %8 : vector<1x128xf32> to vector<16x128xf32>
    %123 = arith.mulf %121, %122 : vector<16x128xf32>
    %124 = vector.broadcast %10 : vector<1x128xf32> to vector<16x128xf32>
    %125 = arith.addf %123, %124 : vector<16x128xf32>
    %126 = vector.shape_cast %125 : vector<16x128xf32> to vector<2x8x128xf32>
    %c0_57 = arith.constant 0 : index
    %c0_58 = arith.constant 0 : index
    %c0_59 = arith.constant 0 : index
    %127 = vector.load %arg12[%c0_57, %c0_58, %c0_59] : memref<2x8x128xf32, #tpu.memory_space<vmem>>, vector<2x8x128xf32>
    tpu.vector_store %arg12[%c0_57, %c0_58, %c0_59], %126 {strides = array<i32>} : memref<2x8x128xf32, #tpu.memory_space<vmem>>, vector<2x8x128xf32>,
    %c0_60 = arith.constant 0 : index
    %c0_61 = arith.constant 0 : index
    %c0_62 = arith.constant 0 : index
    %128 = vector.load %arg11[%c0_60, %c0_61, %c0_62] : memref<2x8x128xf32, #tpu.memory_space<vmem>>, vector<2x8x128xf32>
    tpu.vector_store %arg11[%c0_60, %c0_61, %c0_62], %126 {strides = array<i32>} : memref<2x8x128xf32, #tpu.memory_space<vmem>>, vector<2x8x128xf32>,
    return
  }
  func.func @transform_0(%arg0: i32, %arg1: i32) -> (i32, i32, i32) {
    %c0_i32 = arith.constant 0 : i32
    %c0_i32_0 = arith.constant 0 : i32
    %c0_i32_1 = arith.constant 0 : i32
    return %arg0, %c0_i32, %c0_i32_0 : i32, i32, i32
  }
  func.func @transform_1(%arg0: i32, %arg1: i32) -> (i32, i32, i32, i32) {
    %c0_i32 = arith.constant 0 : i32
    %c0_i32_0 = arith.constant 0 : i32
    %c0_i32_1 = arith.constant 0 : i32
    %c0_i32_2 = arith.constant 0 : i32
    return %arg1, %c0_i32, %c0_i32_0, %c0_i32_1 : i32, i32, i32, i32
  }
  func.func @transform_2(%arg0: i32, %arg1: i32) -> (i32, i32, i32, i32) {
    %c0_i32 = arith.constant 0 : i32
    %c0_i32_0 = arith.constant 0 : i32
    %c0_i32_1 = arith.constant 0 : i32
    %c0_i32_2 = arith.constant 0 : i32
    return %arg1, %c0_i32, %c0_i32_0, %c0_i32_1 : i32, i32, i32, i32
  }
  func.func @transform_3(%arg0: i32, %arg1: i32) -> (i32, i32, i32) {
    %c0_i32 = arith.constant 0 : i32
    %c0_i32_0 = arith.constant 0 : i32
    %c0_i32_1 = arith.constant 0 : i32
    return %arg1, %c0_i32, %c0_i32_0 : i32, i32, i32
  }
  func.func @transform_4(%arg0: i32, %arg1: i32) -> (i32, i32, i32) {
    %c0_i32 = arith.constant 0 : i32
    %c0_i32_0 = arith.constant 0 : i32
    %c0_i32_1 = arith.constant 0 : i32
    return %arg1, %c0_i32, %c0_i32_0 : i32, i32, i32
  }
  func.func @transform_5(%arg0: i32, %arg1: i32) -> (i32, i32, i32) {
    %c0_i32 = arith.constant 0 : i32
    %c0_i32_0 = arith.constant 0 : i32
    %c0_i32_1 = arith.constant 0 : i32
    return %arg1, %c0_i32, %c0_i32_0 : i32, i32, i32
  }
  func.func @transform_6(%arg0: i32, %arg1: i32) -> (i32, i32, i32) {
    %c0_i32 = arith.constant 0 : i32
    %c0_i32_0 = arith.constant 0 : i32
    %c0_i32_1 = arith.constant 0 : i32
    return %arg1, %c0_i32, %c0_i32_0 : i32, i32, i32
  }
  func.func @transform_7(%arg0: i32, %arg1: i32) -> (i32, i32, i32) {
    %c0_i32 = arith.constant 0 : i32
    %c0_i32_0 = arith.constant 0 : i32
    %c0_i32_1 = arith.constant 0 : i32
    return %arg1, %c0_i32, %c0_i32_0 : i32, i32, i32
  }
  func.func @transform_8(%arg0: i32, %arg1: i32) -> (i32, i32, i32) {
    %c0_i32 = arith.constant 0 : i32
    %c0_i32_0 = arith.constant 0 : i32
    %c0_i32_1 = arith.constant 0 : i32
    return %arg1, %c0_i32, %c0_i32_0 : i32, i32, i32
  }
  func.func @transform_9(%arg0: i32, %arg1: i32) -> (i32, i32, i32) {
    %c0_i32 = arith.constant 0 : i32
    %c0_i32_0 = arith.constant 0 : i32
    %c0_i32_1 = arith.constant 0 : i32
    return %arg0, %c0_i32, %c0_i32_0 : i32, i32, i32
  }
}

</mosaic_0001>

<llo_original>
// kernel: tpu_custom_call.1
$region0: #{tpu_custom_call.1}
  #allocation0 [shape = 'u32[]', space=smem, size = 0x4, offset = 0x4, fixed_abs, tag = 'smem constant byte address 0x4 - core index']
  #allocation1 [shape = 'u32[72,128]{1,0:T(1,128)}', space=vmem, size = 0x9000, scoped, tag = 'internal scratch']
  #allocation2 [shape = 'f32[2,8,128]{2,1,0:T(8,128)}', space=vmem, size = 0x2000, scoped, tag = 'scratch operand']
  %s0 = inlined_call_operand.vmem [shape: f32[2,8,128], index: 0, kind: input, shape index: {}]
  %s1 = inlined_call_operand.vmem [shape: f32[3,12,128,32], index: 1, kind: input, shape index: {}]
  %s2 = inlined_call_operand.vmem [shape: f32[3,4,32,128], index: 2, kind: input, shape index: {}]
  %s3 = inlined_call_operand.vmem [shape: f32[3,1,128], index: 3, kind: input, shape index: {}]
  %s4 = inlined_call_operand.vmem [shape: f32[3,1,128], index: 4, kind: input, shape index: {}]
  %s5 = inlined_call_operand.vmem [shape: f32[3,128,256], index: 5, kind: input, shape index: {}]
  %s6 = inlined_call_operand.vmem [shape: f32[3,1,256], index: 6, kind: input, shape index: {}]
  %s7 = inlined_call_operand.vmem [shape: f32[3,256,128], index: 7, kind: input, shape index: {}]
  %s8 = inlined_call_operand.vmem [shape: f32[3,1,128], index: 8, kind: input, shape index: {}]
  %s9 = inlined_call_operand.hbm [shape: f32[2,8,128], index: 9, kind: output, shape index: {}]
  %s10 = sld [smem:[#allocation0]]
  $region73: #{tpu_custom_call.1} parent=0
    _
  %s12 = ssub.s32 1, %s10
  %s13 = scalar_select 0, %s12, %s10
  $region1: #{tpu_custom_call.1} parent=0
    #allocation3 [shape = 'u8[8192]{0}', space=vmem, size = 0x2000, scoped, tag = 'output window, operand 0, single buffered']
    #allocation4 [shape = 's32[2]{0}', space=sflag, size = 0x8, scoped, tag = 'scoped memory for tpu_custom_call.1']
    %14 = vsyncpa [#allocation4], 0
    loop: start=0, step=1, limit=5
    $region2: #{tpu_custom_call.1} parent=1 // loop_pre_header
      _
    $region3: #{tpu_custom_call.1} parent=1 // loop_header
      %s16 = sphi 0, %s20
      %p17 = scmp.ge.s32.totalorder %s16, 5
      %s23 = sphi 0, %s35
      %s24 = sphi 0, %s31
      %s25 = sphi 0, %s23
      %s26 = sphi 0, %s24
      %s27 = sphi 0, %s25
      %s28 = sphi 0, %s26
      %s38 = sphi 0, %s40
      %s41 = sphi 0, %s38
      %s42 = sphi 0, %s41
      %s58 = sphi 0, %s42
      %s64 = sphi 0, %s66
      %s67 = sphi 0, %s64
      %s68 = sphi 0, %s67
      %s84 = sphi 0, %s68
      %s90 = sphi 0, %s92
      %s93 = sphi 0, %s90
      %s94 = sphi 0, %s93
      %s110 = sphi 0, %s94
      %s116 = sphi 0, %s118
      %s119 = sphi 0, %s116
      %s120 = sphi 0, %s119
      %s136 = sphi 0, %s120
      %s142 = sphi 0, %s144
      %s145 = sphi 0, %s142
      %s146 = sphi 0, %s145
      %s162 = sphi 0, %s146
      %s168 = sphi 0, %s170
      %s171 = sphi 0, %s168
      %s172 = sphi 0, %s171
      %s188 = sphi 0, %s172
      %s194 = sphi 0, %s196
      %s197 = sphi 0, %s194
      %s198 = sphi 0, %s197
      %s214 = sphi 0, %s198
      %s220 = sphi 0, %s222
      %s223 = sphi 0, %s220
      %s224 = sphi 0, %s223
      %s240 = sphi 0, %s224
      %s246 = sphi 0, %s248
      %s249 = sphi 0, %s246
      %s250 = sphi 0, %s249
      %s266 = sphi 0, %s250
      %s272 = sphi 0, %s274
      %s275 = sphi 0, %s272
      %s276 = sphi 0, %s275
      %s292 = sphi 0, %s276
    $region4: #{tpu_custom_call.1} parent=1 // loop_header_branch
      %19 = sbr.rel (%p17) target = $region8
    $region5: #{tpu_custom_call.1} parent=1 // loop_body
      %s21 = ssub.s32 %s16, 1
      %s22 = ssub.s32 %s16, 2
      %s29 = sadd.s32 1, %s24
      %p30 = scmp.ge.s32.totalorder %s29, 3
      %s31 = scalar_select %p30, 0, %s29
      %s32 = sadd.s32 1, %s23
      %s33 = scalar_select %p30, %s32, %s23
      %p34 = scmp.ge.s32.totalorder %s33, 1
      %s35 = scalar_select %p34, 0, %s33
      %s36 = ssub.s32 %s23, %s35
      %p37 = scmp.eq.s32.totalorder %s36, 0
      %s39 = sadd.s32 %s38, 1
      %s40 = scalar_select %p37, %s38, %s39
      %p43 = pneg %p37
      %p44 = scmp.eq.s32.totalorder %s16, 2
      %p45 = por %p43, %p44
      %p46 = scmp.ne.s32.totalorder %s38, %s41
      %p47 = scmp.eq.s32.totalorder %s16, 0
      %p48 = por %p46, %p47
      %p49 = scmp.ne.s32.totalorder %s38, %s41
      %p50 = scmp.eq.s32.totalorder %s21, 2
      %p51 = por %p49, %p50
      %p52 = scmp.ne.s32.totalorder %s41, %s42
      %p53 = scmp.eq.s32.totalorder %s21, 0
      %p54 = por %p52, %p53
      %p55 = scmp.ne.s32.totalorder %s41, %s42
      %p56 = scmp.eq.s32.totalorder %s22, 2
      %p57 = por %p55, %p56
      %p59 = scmp.ne.s32.totalorder %s42, %s58
      %p60 = scmp.eq.s32.totalorder %s22, 0
      %p61 = por %p59, %p60
      %s62 = ssub.s32 %s24, %s31
      %p63 = scmp.eq.s32.totalorder %s62, 0
      %s65 = sadd.s32 %s64, 1
      %s66 = scalar_select %p63, %s64, %s65
      %p69 = pneg %p63
      %p70 = scmp.eq.s32.totalorder %s16, 2
      %p71 = por %p69, %p70
      %p72 = scmp.ne.s32.totalorder %s64, %s67
      %p73 = scmp.eq.s32.totalorder %s16, 0
      %p74 = por %p72, %p73
      %p75 = scmp.ne.s32.totalorder %s64, %s67
      %p76 = scmp.eq.s32.totalorder %s21, 2
      %p77 = por %p75, %p76
      %p78 = scmp.ne.s32.totalorder %s67, %s68
      %p79 = scmp.eq.s32.totalorder %s21, 0
      %p80 = por %p78, %p79
      %p81 = scmp.ne.s32.totalorder %s67, %s68
      %p82 = scmp.eq.s32.totalorder %s22, 2
      %p83 = por %p81, %p82
      %p85 = scmp.ne.s32.totalorder %s68, %s84
      %p86 = scmp.eq.s32.totalorder %s22, 0
      %p87 = por %p85, %p86
      %s88 = ssub.s32 %s24, %s31
      %p89 = scmp.eq.s32.totalorder %s88, 0
      %s91 = sadd.s32 %s90, 1
      %s92 = scalar_select %p89, %s90, %s91
      %p95 = pneg %p89
      %p96 = scmp.eq.s32.totalorder %s16, 2
      %p97 = por %p95, %p96
      %p98 = scmp.ne.s32.totalorder %s90, %s93
      %p99 = scmp.eq.s32.totalorder %s16, 0
      %p100 = por %p98, %p99
      %p101 = scmp.ne.s32.totalorder %s90, %s93
      %p102 = scmp.eq.s32.totalorder %s21, 2
      %p103 = por %p101, %p102
      %p104 = scmp.ne.s32.totalorder %s93, %s94
      %p105 = scmp.eq.s32.totalorder %s21, 0
      %p106 = por %p104, %p105
      %p107 = scmp.ne.s32.totalorder %s93, %s94
      %p108 = scmp.eq.s32.totalorder %s22, 2
      %p109 = por %p107, %p108
      %p111 = scmp.ne.s32.totalorder %s94, %s110
      %p112 = scmp.eq.s32.totalorder %s22, 0
      %p113 = por %p111, %p112
      %s114 = ssub.s32 %s24, %s31
      %p115 = scmp.eq.s32.totalorder %s114, 0
      %s117 = sadd.s32 %s116, 1
      %s118 = scalar_select %p115, %s116, %s117
      %p121 = pneg %p115
      %p122 = scmp.eq.s32.totalorder %s16, 2
      %p123 = por %p121, %p122
      %p124 = scmp.ne.s32.totalorder %s116, %s119
      %p125 = scmp.eq.s32.totalorder %s16, 0
      %p126 = por %p124, %p125
      %p127 = scmp.ne.s32.totalorder %s116, %s119
      %p128 = scmp.eq.s32.totalorder %s21, 2
      %p129 = por %p127, %p128
      %p130 = scmp.ne.s32.totalorder %s119, %s120
      %p131 = scmp.eq.s32.totalorder %s21, 0
      %p132 = por %p130, %p131
      %p133 = scmp.ne.s32.totalorder %s119, %s120
      %p134 = scmp.eq.s32.totalorder %s22, 2
      %p135 = por %p133, %p134
      %p137 = scmp.ne.s32.totalorder %s120, %s136
      %p138 = scmp.eq.s32.totalorder %s22, 0
      %p139 = por %p137, %p138
      %s140 = ssub.s32 %s24, %s31
      %p141 = scmp.eq.s32.totalorder %s140, 0
      %s143 = sadd.s32 %s142, 1
      %s144 = scalar_select %p141, %s142, %s143
      %p147 = pneg %p141
      %p148 = scmp.eq.s32.totalorder %s16, 2
      %p149 = por %p147, %p148
      %p150 = scmp.ne.s32.totalorder %s142, %s145
      %p151 = scmp.eq.s32.totalorder %s16, 0
      %p152 = por %p150, %p151
      %p153 = scmp.ne.s32.totalorder %s142, %s145
      %p154 = scmp.eq.s32.totalorder %s21, 2
      %p155 = por %p153, %p154
      %p156 = scmp.ne.s32.totalorder %s145, %s146
      %p157 = scmp.eq.s32.totalorder %s21, 0
      %p158 = por %p156, %p157
      %p159 = scmp.ne.s32.totalorder %s145, %s146
      %p160 = scmp.eq.s32.totalorder %s22, 2
      %p161 = por %p159, %p160
      %p163 = scmp.ne.s32.totalorder %s146, %s162
      %p164 = scmp.eq.s32.totalorder %s22, 0
      %p165 = por %p163, %p164
      %s166 = ssub.s32 %s24, %s31
      %p167 = scmp.eq.s32.totalorder %s166, 0
      %s169 = sadd.s32 %s168, 1
      %s170 = scalar_select %p167, %s168, %s169
      %p173 = pneg %p167
      %p174 = scmp.eq.s32.totalorder %s16, 2
      %p175 = por %p173, %p174
      %p176 = scmp.ne.s32.totalorder %s168, %s171
      %p177 = scmp.eq.s32.totalorder %s16, 0
      %p178 = por %p176, %p177
      %p179 = scmp.ne.s32.totalorder %s168, %s171
      %p180 = scmp.eq.s32.totalorder %s21, 2
      %p181 = por %p179, %p180
      %p182 = scmp.ne.s32.totalorder %s171, %s172
      %p183 = scmp.eq.s32.totalorder %s21, 0
      %p184 = por %p182, %p183
      %p185 = scmp.ne.s32.totalorder %s171, %s172
      %p186 = scmp.eq.s32.totalorder %s22, 2
      %p187 = por %p185, %p186
      %p189 = scmp.ne.s32.totalorder %s172, %s188
      %p190 = scmp.eq.s32.totalorder %s22, 0
      %p191 = por %p189, %p190
      %s192 = ssub.s32 %s24, %s31
      %p193 = scmp.eq.s32.totalorder %s192, 0
      %s195 = sadd.s32 %s194, 1
      %s196 = scalar_select %p193, %s194, %s195
      %p199 = pneg %p193
      %p200 = scmp.eq.s32.totalorder %s16, 2
      %p201 = por %p199, %p200
      %p202 = scmp.ne.s32.totalorder %s194, %s197
      %p203 = scmp.eq.s32.totalorder %s16, 0
      %p204 = por %p202, %p203
      %p205 = scmp.ne.s32.totalorder %s194, %s197
      %p206 = scmp.eq.s32.totalorder %s21, 2
      %p207 = por %p205, %p206
      %p208 = scmp.ne.s32.totalorder %s197, %s198
      %p209 = scmp.eq.s32.totalorder %s21, 0
      %p210 = por %p208, %p209
      %p211 = scmp.ne.s32.totalorder %s197, %s198
      %p212 = scmp.eq.s32.totalorder %s22, 2
      %p213 = por %p211, %p212
      %p215 = scmp.ne.s32.totalorder %s198, %s214
      %p216 = scmp.eq.s32.totalorder %s22, 0
      %p217 = por %p215, %p216
      %s218 = ssub.s32 %s24, %s31
      %p219 = scmp.eq.s32.totalorder %s218, 0
      %s221 = sadd.s32 %s220, 1
      %s222 = scalar_select %p219, %s220, %s221
      %p225 = pneg %p219
      %p226 = scmp.eq.s32.totalorder %s16, 2
      %p227 = por %p225, %p226
      %p228 = scmp.ne.s32.totalorder %s220, %s223
      %p229 = scmp.eq.s32.totalorder %s16, 0
      %p230 = por %p228, %p229
      %p231 = scmp.ne.s32.totalorder %s220, %s223
      %p232 = scmp.eq.s32.totalorder %s21, 2
      %p233 = por %p231, %p232
      %p234 = scmp.ne.s32.totalorder %s223, %s224
      %p235 = scmp.eq.s32.totalorder %s21, 0
      %p236 = por %p234, %p235
      %p237 = scmp.ne.s32.totalorder %s223, %s224
      %p238 = scmp.eq.s32.totalorder %s22, 2
      %p239 = por %p237, %p238
      %p241 = scmp.ne.s32.totalorder %s224, %s240
      %p242 = scmp.eq.s32.totalorder %s22, 0
      %p243 = por %p241, %p242
      %s244 = ssub.s32 %s24, %s31
      %p245 = scmp.eq.s32.totalorder %s244, 0
      %s247 = sadd.s32 %s246, 1
      %s248 = scalar_select %p245, %s246, %s247
      %p251 = pneg %p245
      %p252 = scmp.eq.s32.totalorder %s16, 2
      %p253 = por %p251, %p252
      %p254 = scmp.ne.s32.totalorder %s246, %s249
      %p255 = scmp.eq.s32.totalorder %s16, 0
      %p256 = por %p254, %p255
      %p257 = scmp.ne.s32.totalorder %s246, %s249
      %p258 = scmp.eq.s32.totalorder %s21, 2
      %p259 = por %p257, %p258
      %p260 = scmp.ne.s32.totalorder %s249, %s250
      %p261 = scmp.eq.s32.totalorder %s21, 0
      %p262 = por %p260, %p261
      %p263 = scmp.ne.s32.totalorder %s249, %s250
      %p264 = scmp.eq.s32.totalorder %s22, 2
      %p265 = por %p263, %p264
      %p267 = scmp.ne.s32.totalorder %s250, %s266
      %p268 = scmp.eq.s32.totalorder %s22, 0
      %p269 = por %p267, %p268
      %s270 = ssub.s32 %s23, %s35
      %p271 = scmp.eq.s32.totalorder %s270, 0
      %s273 = sadd.s32 %s272, 1
      %s274 = scalar_select %p271, %s272, %s273
      %p277 = pneg %p271
      %p278 = scmp.eq.s32.totalorder %s16, 2
      %p279 = por %p277, %p278
      %p280 = scmp.ne.s32.totalorder %s272, %s275
      %p281 = scmp.eq.s32.totalorder %s16, 0
      %p282 = por %p280, %p281
      %p283 = scmp.ne.s32.totalorder %s272, %s275
      %p284 = scmp.eq.s32.totalorder %s21, 2
      %p285 = por %p283, %p284
      %p286 = scmp.ne.s32.totalorder %s275, %s276
      %p287 = scmp.eq.s32.totalorder %s21, 0
      %p288 = por %p286, %p287
      %p289 = scmp.ne.s32.totalorder %s275, %s276
      %p290 = scmp.eq.s32.totalorder %s22, 2
      %p291 = por %p289, %p290
      %p293 = scmp.ne.s32.totalorder %s276, %s292
      %p294 = scmp.eq.s32.totalorder %s22, 0
      %p295 = por %p293, %p294
      %p296 = scmp.le.s32.totalorder 1, %s16
      %p297 = scmp.lt.s32.totalorder %s16, 4
      %p298 = pnand %p296, %p297
      %p299 = pneg %p298
      // Predicated region
      $region9: #{tpu_custom_call.1} parent=5 // pred_check
        _
      $region10: #{tpu_custom_call.1} parent=5 // pred_check_branch
        %301 = sbr.rel (%p298) target = $region12
      $region11: #{tpu_custom_call.1} parent=5 // pred_region
        %s302 = ssub.s32 %s16, 1
        // Predicated region
        $region13: #{tpu_custom_call.1} parent=11 // pred_check
          %p303 = pneg %p54
        $region14: #{tpu_custom_call.1} parent=11 // pred_check_branch
          %305 = sbr.rel (%p303) target = $region16
        $region15: #{tpu_custom_call.1} parent=11 // pred_region
          %s306 = smul.u32 2, %s25
          %p307 = scmp.lt.s32.totalorder %s306, 1
          %s308 = scalar_select %p307, %s306, 1
          %s309 = smul.addr %s308, 8
          %s310 = scalar_lea.vmem %s0, %s309
          %s311 = smul.u32 2, %s25
        $region16: #{tpu_custom_call.1} parent=11 // pred_fallthru
          _
      $region12: #{tpu_custom_call.1} parent=5 // pred_fallthru
        _
      %p312 = scmp.lt.s32.totalorder %s16, 3
      // Predicated region
      $region17: #{tpu_custom_call.1} parent=5 // pred_check
        %p313 = pneg %p312
      $region18: #{tpu_custom_call.1} parent=5 // pred_check_branch
        %315 = sbr.rel (%p313) target = $region20
      $region19: #{tpu_custom_call.1} parent=5 // pred_region
        // Predicated region
        $region21: #{tpu_custom_call.1} parent=19 // pred_check
          %p316 = pneg %p74
        $region22: #{tpu_custom_call.1} parent=19 // pred_check_branch
          %318 = sbr.rel (%p316) target = $region24
        $region23: #{tpu_custom_call.1} parent=19 // pred_region
          %p319 = scmp.lt.s32.totalorder %s24, 2
          %s320 = scalar_select %p319, %s24, 2
          %s321 = smul.addr %s320, 192
          %s322 = smul.addr %s321, 8
          %s323 = scalar_lea.vmem %s1, %s322
        $region24: #{tpu_custom_call.1} parent=19 // pred_fallthru
          _
        // Predicated region
        $region25: #{tpu_custom_call.1} parent=19 // pred_check
          %p324 = pneg %p100
        $region26: #{tpu_custom_call.1} parent=19 // pred_check_branch
          %326 = sbr.rel (%p324) target = $region28
        $region27: #{tpu_custom_call.1} parent=19 // pred_region
          %p327 = scmp.lt.s32.totalorder %s24, 2
          %s328 = scalar_select %p327, %s24, 2
          %s329 = smul.addr %s328, 16
          %s330 = smul.addr %s329, 8
          %s331 = scalar_lea.vmem %s2, %s330
        $region28: #{tpu_custom_call.1} parent=19 // pred_fallthru
          _
        // Predicated region
        $region29: #{tpu_custom_call.1} parent=19 // pred_check
          %p332 = pneg %p126
        $region30: #{tpu_custom_call.1} parent=19 // pred_check_branch
          %334 = sbr.rel (%p332) target = $region32
        $region31: #{tpu_custom_call.1} parent=19 // pred_region
          %p335 = scmp.lt.s32.totalorder %s24, 2
          %s336 = scalar_select %p335, %s24, 2
          %s337 = scalar_lea.vmem %s3, %s336
        $region32: #{tpu_custom_call.1} parent=19 // pred_fallthru
          _
        // Predicated region
        $region33: #{tpu_custom_call.1} parent=19 // pred_check
          %p338 = pneg %p152
        $region34: #{tpu_custom_call.1} parent=19 // pred_check_branch
          %340 = sbr.rel (%p338) target = $region36
        $region35: #{tpu_custom_call.1} parent=19 // pred_region
          %p341 = scmp.lt.s32.totalorder %s24, 2
          %s342 = scalar_select %p341, %s24, 2
          %s343 = scalar_lea.vmem %s4, %s342
        $region36: #{tpu_custom_call.1} parent=19 // pred_fallthru
          _
        // Predicated region
        $region37: #{tpu_custom_call.1} parent=19 // pred_check
          %p344 = pneg %p178
        $region38: #{tpu_custom_call.1} parent=19 // pred_check_branch
          %346 = sbr.rel (%p344) target = $region40
        $region39: #{tpu_custom_call.1} parent=19 // pred_region
          %p347 = scmp.lt.s32.totalorder %s24, 2
          %s348 = scalar_select %p347, %s24, 2
          %s349 = smul.addr %s348, 32
          %s350 = smul.addr %s349, 8
          %s351 = scalar_lea.vmem %s5, %s350
        $region40: #{tpu_custom_call.1} parent=19 // pred_fallthru
          _
        // Predicated region
        $region41: #{tpu_custom_call.1} parent=19 // pred_check
          %p352 = pneg %p204
        $region42: #{tpu_custom_call.1} parent=19 // pred_check_branch
          %354 = sbr.rel (%p352) target = $region44
        $region43: #{tpu_custom_call.1} parent=19 // pred_region
          %p355 = scmp.lt.s32.totalorder %s24, 2
          %s356 = scalar_select %p355, %s24, 2
          %s357 = smul.addr %s356, 2
          %s358 = scalar_lea.vmem %s6, %s357
        $region44: #{tpu_custom_call.1} parent=19 // pred_fallthru
          _
        // Predicated region
        $region45: #{tpu_custom_call.1} parent=19 // pred_check
          %p359 = pneg %p230
        $region46: #{tpu_custom_call.1} parent=19 // pred_check_branch
          %361 = sbr.rel (%p359) target = $region48
        $region47: #{tpu_custom_call.1} parent=19 // pred_region
          %p362 = scmp.lt.s32.totalorder %s24, 2
          %s363 = scalar_select %p362, %s24, 2
          %s364 = smul.addr %s363, 32
          %s365 = smul.addr %s364, 8
          %s366 = scalar_lea.vmem %s7, %s365
        $region48: #{tpu_custom_call.1} parent=19 // pred_fallthru
          _
        // Predicated region
        $region49: #{tpu_custom_call.1} parent=19 // pred_check
          %p367 = pneg %p256
        $region50: #{tpu_custom_call.1} parent=19 // pred_check_branch
          %369 = sbr.rel (%p367) target = $region52
        $region51: #{tpu_custom_call.1} parent=19 // pred_region
          %p370 = scmp.lt.s32.totalorder %s24, 2
          %s371 = scalar_select %p370, %s24, 2
          %s372 = scalar_lea.vmem %s8, %s371
        $region52: #{tpu_custom_call.1} parent=19 // pred_fallthru
          _
      $region20: #{tpu_custom_call.1} parent=5 // pred_fallthru
        _
      %p373 = scmp.le.s32.totalorder 1, %s16
      %p374 = scmp.lt.s32.totalorder %s16, 4
      %p375 = pnand %p373, %p374
      %p376 = pneg %p375
      // Predicated region
      $region53: #{tpu_custom_call.1} parent=5 // pred_check
        _
      $region54: #{tpu_custom_call.1} parent=5 // pred_check_branch
        %378 = sbr.rel (%p375) target = $region56
      $region55: #{tpu_custom_call.1} parent=5 // pred_region
        %s379 = ssub.s32 %s16, 1
        %s380 = smul.u32 2, %s25
        %p381 = scmp.lt.s32.totalorder %s380, 1
        %s382 = scalar_select %p381, %s380, 1
        %s383 = smul.addr %s382, 8
        %s384 = scalar_lea.vmem %s0, %s383
        %p385 = pneg %p54
        %p386 = pneg %p51
        %p387 = scmp.lt.s32.totalorder %s26, 2
        %s388 = scalar_select %p387, %s26, 2
        %s389 = smul.addr %s388, 192
        %s390 = smul.addr %s389, 8
        %s391 = scalar_lea.vmem %s1, %s390
        %p392 = pneg %p80
        %p393 = pneg %p77
        %p394 = scmp.lt.s32.totalorder %s26, 2
        %s395 = scalar_select %p394, %s26, 2
        %s396 = smul.addr %s395, 16
        %s397 = smul.addr %s396, 8
        %s398 = scalar_lea.vmem %s2, %s397
        %p399 = pneg %p106
        %p400 = pneg %p103
        %p401 = scmp.lt.s32.totalorder %s26, 2
        %s402 = scalar_select %p401, %s26, 2
        %s403 = scalar_lea.vmem %s3, %s402
        %p404 = pneg %p132
        %p405 = pneg %p129
        %p406 = scmp.lt.s32.totalorder %s26, 2
        %s407 = scalar_select %p406, %s26, 2
        %s408 = scalar_lea.vmem %s4, %s407
        %p409 = pneg %p158
        %p410 = pneg %p155
        %p411 = scmp.lt.s32.totalorder %s26, 2
        %s412 = scalar_select %p411, %s26, 2
        %s413 = smul.addr %s412, 32
        %s414 = smul.addr %s413, 8
        %s415 = scalar_lea.vmem %s5, %s414
        %p416 = pneg %p184
        %p417 = pneg %p181
        %p418 = scmp.lt.s32.totalorder %s26, 2
        %s419 = scalar_select %p418, %s26, 2
        %s420 = smul.addr %s419, 2
        %s421 = scalar_lea.vmem %s6, %s420
        %p422 = pneg %p210
        %p423 = pneg %p207
        %p424 = scmp.lt.s32.totalorder %s26, 2
        %s425 = scalar_select %p424, %s26, 2
        %s426 = smul.addr %s425, 32
        %s427 = smul.addr %s426, 8
        %s428 = scalar_lea.vmem %s7, %s427
        %p429 = pneg %p236
        %p430 = pneg %p233
        %p431 = scmp.lt.s32.totalorder %s26, 2
        %s432 = scalar_select %p431, %s26, 2
        %s433 = scalar_lea.vmem %s8, %s432
        %p434 = pneg %p262
        %p435 = pneg %p259
        %p436 = pneg %p288
        %p437 = pneg %p285
        %s438 = smul.u32 2, %s25
        %p439 = scmp.lt.s32.totalorder %s438, 1
        %s440 = scalar_select %p439, %s438, 1
        %s441 = smul.addr %s440, 8
        %s442 = scalar_lea.vmem %s0, %s441
        %s443 = smul.u32 2, %s25
        %p444 = scmp.lt.s32.totalorder %s26, 2
        %s445 = scalar_select %p444, %s26, 2
        %s446 = smul.addr %s445, 192
        %s447 = smul.addr %s446, 8
        %s448 = scalar_lea.vmem %s1, %s447
        %p449 = scmp.lt.s32.totalorder %s26, 2
        %s450 = scalar_select %p449, %s26, 2
        %s451 = smul.addr %s450, 16
        %s452 = smul.addr %s451, 8
        %s453 = scalar_lea.vmem %s2, %s452
        %p454 = scmp.lt.s32.totalorder %s26, 2
        %s455 = scalar_select %p454, %s26, 2
        %s456 = scalar_lea.vmem %s3, %s455
        %p457 = scmp.lt.s32.totalorder %s26, 2
        %s458 = scalar_select %p457, %s26, 2
        %s459 = scalar_lea.vmem %s4, %s458
        %p460 = scmp.lt.s32.totalorder %s26, 2
        %s461 = scalar_select %p460, %s26, 2
        %s462 = smul.addr %s461, 32
        %s463 = smul.addr %s462, 8
        %s464 = scalar_lea.vmem %s5, %s463
        %p465 = scmp.lt.s32.totalorder %s26, 2
        %s466 = scalar_select %p465, %s26, 2
        %s467 = smul.addr %s466, 2
        %s468 = scalar_lea.vmem %s6, %s467
        %p469 = scmp.lt.s32.totalorder %s26, 2
        %s470 = scalar_select %p469, %s26, 2
        %s471 = smul.addr %s470, 32
        %s472 = smul.addr %s471, 8
        %s473 = scalar_lea.vmem %s7, %s472
        %p474 = scmp.lt.s32.totalorder %s26, 2
        %s475 = scalar_select %p474, %s26, 2
        %s476 = scalar_lea.vmem %s8, %s475
        %s477 = smul.u32 2, %s25
        %p478 = scmp.eq.s32.totalorder %s26, 0
        // Predicated region
        $region57: #{tpu_custom_call.1} parent=55 // pred_check
          %p479 = pneg %p478
        $region58: #{tpu_custom_call.1} parent=55 // pred_check_branch
          %481 = sbr.rel (%p479) target = $region60
        $region59: #{tpu_custom_call.1} parent=55 // pred_region
          %v482 = vld [vmem:[%s442] sm:$0xff]
          %v483 = vld [vmem:[%s442 + $0x8] sm:$0xff]
          %484 = vst [vmem:[#allocation2] sm:$0xff] %v482
          %485 = vst [vmem:[#allocation2 + $0x8] sm:$0xff] %v483
        $region60: #{tpu_custom_call.1} parent=55 // pred_fallthru
          _
        %v486 = vld [vmem:[%s448] sm:$0xff]
        %v487 = vld [vmem:[%s448 + $0x8] sm:$0xff]
        %v488 = vld [vmem:[%s448 + $0x10] sm:$0xff]
        %v489 = vld [vmem:[%s448 + $0x18] sm:$0xff]
        %v490 = vld [vmem:[%s448 + $0x20] sm:$0xff]
        %v491 = vld [vmem:[%s448 + $0x28] sm:$0xff]
        %v492 = vld [vmem:[%s448 + $0x30] sm:$0xff]
        %v493 = vld [vmem:[%s448 + $0x38] sm:$0xff]
        %v494 = vld [vmem:[%s448 + $0x40] sm:$0xff]
        %v495 = vld [vmem:[%s448 + $0x48] sm:$0xff]
        %v496 = vld [vmem:[%s448 + $0x50] sm:$0xff]
        %v497 = vld [vmem:[%s448 + $0x58] sm:$0xff]
        %v498 = vld [vmem:[%s448 + $0x60] sm:$0xff]
        %v499 = vld [vmem:[%s448 + $0x68] sm:$0xff]
        %v500 = vld [vmem:[%s448 + $0x70] sm:$0xff]
        %v501 = vld [vmem:[%s448 + $0x78] sm:$0xff]
        %v502 = vld [vmem:[%s448 + $0x80] sm:$0xff]
        %v503 = vld [vmem:[%s448 + $0x88] sm:$0xff]
        %v504 = vld [vmem:[%s448 + $0x90] sm:$0xff]
        %v505 = vld [vmem:[%s448 + $0x98] sm:$0xff]
        %v506 = vld [vmem:[%s448 + $0xa0] sm:$0xff]
        %v507 = vld [vmem:[%s448 + $0xa8] sm:$0xff]
        %v508 = vld [vmem:[%s448 + $0xb0] sm:$0xff]
        %v509 = vld [vmem:[%s448 + $0xb8] sm:$0xff]
        %v510 = vld [vmem:[%s448 + $0xc0] sm:$0xff]
        %v511 = vld [vmem:[%s448 + $0xc8] sm:$0xff]
        %v512 = vld [vmem:[%s448 + $0xd0] sm:$0xff]
        %v513 = vld [vmem:[%s448 + $0xd8] sm:$0xff]
        %v514 = vld [vmem:[%s448 + $0xe0] sm:$0xff]
        %v515 = vld [vmem:[%s448 + $0xe8] sm:$0xff]
        %v516 = vld [vmem:[%s448 + $0xf0] sm:$0xff]
        %v517 = vld [vmem:[%s448 + $0xf8] sm:$0xff]
        %v518 = vld [vmem:[%s448 + $0x100] sm:$0xff]
        %v519 = vld [vmem:[%s448 + $0x108] sm:$0xff]
        %v520 = vld [vmem:[%s448 + $0x110] sm:$0xff]
        %v521 = vld [vmem:[%s448 + $0x118] sm:$0xff]
        %v522 = vld [vmem:[%s448 + $0x120] sm:$0xff]
        %v523 = vld [vmem:[%s448 + $0x128] sm:$0xff]
        %v524 = vld [vmem:[%s448 + $0x130] sm:$0xff]
        %v525 = vld [vmem:[%s448 + $0x138] sm:$0xff]
        %v526 = vld [vmem:[%s448 + $0x140] sm:$0xff]
        %v527 = vld [vmem:[%s448 + $0x148] sm:$0xff]
        %v528 = vld [vmem:[%s448 + $0x150] sm:$0xff]
        %v529 = vld [vmem:[%s448 + $0x158] sm:$0xff]
        %v530 = vld [vmem:[%s448 + $0x160] sm:$0xff]
        %v531 = vld [vmem:[%s448 + $0x168] sm:$0xff]
        %v532 = vld [vmem:[%s448 + $0x170] sm:$0xff]
        %v533 = vld [vmem:[%s448 + $0x178] sm:$0xff]
        %v534 = vld [vmem:[%s448 + $0x180] sm:$0xff]
        %v535 = vld [vmem:[%s448 + $0x188] sm:$0xff]
        %v536 = vld [vmem:[%s448 + $0x190] sm:$0xff]
        %v537 = vld [vmem:[%s448 + $0x198] sm:$0xff]
        %v538 = vld [vmem:[%s448 + $0x1a0] sm:$0xff]
        %v539 = vld [vmem:[%s448 + $0x1a8] sm:$0xff]
        %v540 = vld [vmem:[%s448 + $0x1b0] sm:$0xff]
        %v541 = vld [vmem:[%s448 + $0x1b8] sm:$0xff]
        %v542 = vld [vmem:[%s448 + $0x1c0] sm:$0xff]
        %v543 = vld [vmem:[%s448 + $0x1c8] sm:$0xff]
        %v544 = vld [vmem:[%s448 + $0x1d0] sm:$0xff]
        %v545 = vld [vmem:[%s448 + $0x1d8] sm:$0xff]
        %v546 = vld [vmem:[%s448 + $0x1e0] sm:$0xff]
        %v547 = vld [vmem:[%s448 + $0x1e8] sm:$0xff]
        %v548 = vld [vmem:[%s448 + $0x1f0] sm:$0xff]
        %v549 = vld [vmem:[%s448 + $0x1f8] sm:$0xff]
        %v550 = vld [vmem:[%s448 + $0x200] sm:$0xff]
        %v551 = vld [vmem:[%s448 + $0x208] sm:$0xff]
        %v552 = vld [vmem:[%s448 + $0x210] sm:$0xff]
        %v553 = vld [vmem:[%s448 + $0x218] sm:$0xff]
        %v554 = vld [vmem:[%s448 + $0x220] sm:$0xff]
        %v555 = vld [vmem:[%s448 + $0x228] sm:$0xff]
        %v556 = vld [vmem:[%s448 + $0x230] sm:$0xff]
        %v557 = vld [vmem:[%s448 + $0x238] sm:$0xff]
        %v558 = vld [vmem:[%s448 + $0x240] sm:$0xff]
        %v559 = vld [vmem:[%s448 + $0x248] sm:$0xff]
        %v560 = vld [vmem:[%s448 + $0x250] sm:$0xff]
        %v561 = vld [vmem:[%s448 + $0x258] sm:$0xff]
        %v562 = vld [vmem:[%s448 + $0x260] sm:$0xff]
        %v563 = vld [vmem:[%s448 + $0x268] sm:$0xff]
        %v564 = vld [vmem:[%s448 + $0x270] sm:$0xff]
        %v565 = vld [vmem:[%s448 + $0x278] sm:$0xff]
        %v566 = vld [vmem:[%s448 + $0x280] sm:$0xff]
        %v567 = vld [vmem:[%s448 + $0x288] sm:$0xff]
        %v568 = vld [vmem:[%s448 + $0x290] sm:$0xff]
        %v569 = vld [vmem:[%s448 + $0x298] sm:$0xff]
        %v570 = vld [vmem:[%s448 + $0x2a0] sm:$0xff]
        %v571 = vld [vmem:[%s448 + $0x2a8] sm:$0xff]
        %v572 = vld [vmem:[%s448 + $0x2b0] sm:$0xff]
        %v573 = vld [vmem:[%s448 + $0x2b8] sm:$0xff]
        %v574 = vld [vmem:[%s448 + $0x2c0] sm:$0xff]
        %v575 = vld [vmem:[%s448 + $0x2c8] sm:$0xff]
        %v576 = vld [vmem:[%s448 + $0x2d0] sm:$0xff]
        %v577 = vld [vmem:[%s448 + $0x2d8] sm:$0xff]
        %v578 = vld [vmem:[%s448 + $0x2e0] sm:$0xff]
        %v579 = vld [vmem:[%s448 + $0x2e8] sm:$0xff]
        %v580 = vld [vmem:[%s448 + $0x2f0] sm:$0xff]
        %v581 = vld [vmem:[%s448 + $0x2f8] sm:$0xff]
        %v582 = vld [vmem:[%s448 + $0x300] sm:$0xff]
        %v583 = vld [vmem:[%s448 + $0x308] sm:$0xff]
        %v584 = vld [vmem:[%s448 + $0x310] sm:$0xff]
        %v585 = vld [vmem:[%s448 + $0x318] sm:$0xff]
        %v586 = vld [vmem:[%s448 + $0x320] sm:$0xff]
        %v587 = vld [vmem:[%s448 + $0x328] sm:$0xff]
        %v588 = vld [vmem:[%s448 + $0x330] sm:$0xff]
        %v589 = vld [vmem:[%s448 + $0x338] sm:$0xff]
        %v590 = vld [vmem:[%s448 + $0x340] sm:$0xff]
        %v591 = vld [vmem:[%s448 + $0x348] sm:$0xff]
        %v592 = vld [vmem:[%s448 + $0x350] sm:$0xff]
        %v593 = vld [vmem:[%s448 + $0x358] sm:$0xff]
        %v594 = vld [vmem:[%s448 + $0x360] sm:$0xff]
        %v595 = vld [vmem:[%s448 + $0x368] sm:$0xff]
        %v596 = vld [vmem:[%s448 + $0x370] sm:$0xff]
        %v597 = vld [vmem:[%s448 + $0x378] sm:$0xff]
        %v598 = vld [vmem:[%s448 + $0x380] sm:$0xff]
        %v599 = vld [vmem:[%s448 + $0x388] sm:$0xff]
        %v600 = vld [vmem:[%s448 + $0x390] sm:$0xff]
        %v601 = vld [vmem:[%s448 + $0x398] sm:$0xff]
        %v602 = vld [vmem:[%s448 + $0x3a0] sm:$0xff]
        %v603 = vld [vmem:[%s448 + $0x3a8] sm:$0xff]
        %v604 = vld [vmem:[%s448 + $0x3b0] sm:$0xff]
        %v605 = vld [vmem:[%s448 + $0x3b8] sm:$0xff]
        %v606 = vld [vmem:[%s448 + $0x3c0] sm:$0xff]
        %v607 = vld [vmem:[%s448 + $0x3c8] sm:$0xff]
        %v608 = vld [vmem:[%s448 + $0x3d0] sm:$0xff]
        %v609 = vld [vmem:[%s448 + $0x3d8] sm:$0xff]
        %v610 = vld [vmem:[%s448 + $0x3e0] sm:$0xff]
        %v611 = vld [vmem:[%s448 + $0x3e8] sm:$0xff]
        %v612 = vld [vmem:[%s448 + $0x3f0] sm:$0xff]
        %v613 = vld [vmem:[%s448 + $0x3f8] sm:$0xff]
        %v614 = vld [vmem:[%s448 + $0x400] sm:$0xff]
        %v615 = vld [vmem:[%s448 + $0x408] sm:$0xff]
        %v616 = vld [vmem:[%s448 + $0x410] sm:$0xff]
        %v617 = vld [vmem:[%s448 + $0x418] sm:$0xff]
        %v618 = vld [vmem:[%s448 + $0x420] sm:$0xff]
        %v619 = vld [vmem:[%s448 + $0x428] sm:$0xff]
        %v620 = vld [vmem:[%s448 + $0x430] sm:$0xff]
        %v621 = vld [vmem:[%s448 + $0x438] sm:$0xff]
        %v622 = vld [vmem:[%s448 + $0x440] sm:$0xff]
        %v623 = vld [vmem:[%s448 + $0x448] sm:$0xff]
        %v624 = vld [vmem:[%s448 + $0x450] sm:$0xff]
        %v625 = vld [vmem:[%s448 + $0x458] sm:$0xff]
        %v626 = vld [vmem:[%s448 + $0x460] sm:$0xff]
        %v627 = vld [vmem:[%s448 + $0x468] sm:$0xff]
        %v628 = vld [vmem:[%s448 + $0x470] sm:$0xff]
        %v629 = vld [vmem:[%s448 + $0x478] sm:$0xff]
        %v630 = vld [vmem:[%s448 + $0x480] sm:$0xff]
        %v631 = vld [vmem:[%s448 + $0x488] sm:$0xff]
        %v632 = vld [vmem:[%s448 + $0x490] sm:$0xff]
        %v633 = vld [vmem:[%s448 + $0x498] sm:$0xff]
        %v634 = vld [vmem:[%s448 + $0x4a0] sm:$0xff]
        %v635 = vld [vmem:[%s448 + $0x4a8] sm:$0xff]
        %v636 = vld [vmem:[%s448 + $0x4b0] sm:$0xff]
        %v637 = vld [vmem:[%s448 + $0x4b8] sm:$0xff]
        %v638 = vld [vmem:[%s448 + $0x4c0] sm:$0xff]
        %v639 = vld [vmem:[%s448 + $0x4c8] sm:$0xff]
        %v640 = vld [vmem:[%s448 + $0x4d0] sm:$0xff]
        %v641 = vld [vmem:[%s448 + $0x4d8] sm:$0xff]
        %v642 = vld [vmem:[%s448 + $0x4e0] sm:$0xff]
        %v643 = vld [vmem:[%s448 + $0x4e8] sm:$0xff]
        %v644 = vld [vmem:[%s448 + $0x4f0] sm:$0xff]
        %v645 = vld [vmem:[%s448 + $0x4f8] sm:$0xff]
        %v646 = vld [vmem:[%s448 + $0x500] sm:$0xff]
        %v647 = vld [vmem:[%s448 + $0x508] sm:$0xff]
        %v648 = vld [vmem:[%s448 + $0x510] sm:$0xff]
        %v649 = vld [vmem:[%s448 + $0x518] sm:$0xff]
        %v650 = vld [vmem:[%s448 + $0x520] sm:$0xff]
        %v651 = vld [vmem:[%s448 + $0x528] sm:$0xff]
        %v652 = vld [vmem:[%s448 + $0x530] sm:$0xff]
        %v653 = vld [vmem:[%s448 + $0x538] sm:$0xff]
        %v654 = vld [vmem:[%s448 + $0x540] sm:$0xff]
        %v655 = vld [vmem:[%s448 + $0x548] sm:$0xff]
        %v656 = vld [vmem:[%s448 + $0x550] sm:$0xff]
        %v657 = vld [vmem:[%s448 + $0x558] sm:$0xff]
        %v658 = vld [vmem:[%s448 + $0x560] sm:$0xff]
        %v659 = vld [vmem:[%s448 + $0x568] sm:$0xff]
        %v660 = vld [vmem:[%s448 + $0x570] sm:$0xff]
        %v661 = vld [vmem:[%s448 + $0x578] sm:$0xff]
        %v662 = vld [vmem:[%s448 + $0x580] sm:$0xff]
        %v663 = vld [vmem:[%s448 + $0x588] sm:$0xff]
        %v664 = vld [vmem:[%s448 + $0x590] sm:$0xff]
        %v665 = vld [vmem:[%s448 + $0x598] sm:$0xff]
        %v666 = vld [vmem:[%s448 + $0x5a0] sm:$0xff]
        %v667 = vld [vmem:[%s448 + $0x5a8] sm:$0xff]
        %v668 = vld [vmem:[%s448 + $0x5b0] sm:$0xff]
        %v669 = vld [vmem:[%s448 + $0x5b8] sm:$0xff]
        %v670 = vld [vmem:[%s448 + $0x5c0] sm:$0xff]
        %v671 = vld [vmem:[%s448 + $0x5c8] sm:$0xff]
        %v672 = vld [vmem:[%s448 + $0x5d0] sm:$0xff]
        %v673 = vld [vmem:[%s448 + $0x5d8] sm:$0xff]
        %v674 = vld [vmem:[%s448 + $0x5e0] sm:$0xff]
        %v675 = vld [vmem:[%s448 + $0x5e8] sm:$0xff]
        %v676 = vld [vmem:[%s448 + $0x5f0] sm:$0xff]
        %v677 = vld [vmem:[%s448 + $0x5f8] sm:$0xff]
        %v678 = vld [vmem:[%s453] sm:$0xff]
        %v679 = vld [vmem:[%s453 + $0x8] sm:$0xff]
        %v680 = vld [vmem:[%s453 + $0x10] sm:$0xff]
        %v681 = vld [vmem:[%s453 + $0x18] sm:$0xff]
        %v682 = vld [vmem:[%s453 + $0x20] sm:$0xff]
        %v683 = vld [vmem:[%s453 + $0x28] sm:$0xff]
        %v684 = vld [vmem:[%s453 + $0x30] sm:$0xff]
        %v685 = vld [vmem:[%s453 + $0x38] sm:$0xff]
        %v686 = vld [vmem:[%s453 + $0x40] sm:$0xff]
        %v687 = vld [vmem:[%s453 + $0x48] sm:$0xff]
        %v688 = vld [vmem:[%s453 + $0x50] sm:$0xff]
        %v689 = vld [vmem:[%s453 + $0x58] sm:$0xff]
        %v690 = vld [vmem:[%s453 + $0x60] sm:$0xff]
        %v691 = vld [vmem:[%s453 + $0x68] sm:$0xff]
        %v692 = vld [vmem:[%s453 + $0x70] sm:$0xff]
        %v693 = vld [vmem:[%s453 + $0x78] sm:$0xff]
        %v694 = vld [vmem:[%s456] sm:$0x1]
        %v695 = vld [vmem:[%s459] sm:$0x1]
        %v696 = vld [vmem:[%s464] sm:$0xff]
        %v697 = vld [vmem:[%s464 + $0x8] sm:$0xff]
        %v698 = vld [vmem:[%s464 + $0x10] sm:$0xff]
        %v699 = vld [vmem:[%s464 + $0x18] sm:$0xff]
        %v700 = vld [vmem:[%s464 + $0x20] sm:$0xff]
        %v701 = vld [vmem:[%s464 + $0x28] sm:$0xff]
        %v702 = vld [vmem:[%s464 + $0x30] sm:$0xff]
        %v703 = vld [vmem:[%s464 + $0x38] sm:$0xff]
        %v704 = vld [vmem:[%s464 + $0x40] sm:$0xff]
        %v705 = vld [vmem:[%s464 + $0x48] sm:$0xff]
        %v706 = vld [vmem:[%s464 + $0x50] sm:$0xff]
        %v707 = vld [vmem:[%s464 + $0x58] sm:$0xff]
        %v708 = vld [vmem:[%s464 + $0x60] sm:$0xff]
        %v709 = vld [vmem:[%s464 + $0x68] sm:$0xff]
        %v710 = vld [vmem:[%s464 + $0x70] sm:$0xff]
        %v711 = vld [vmem:[%s464 + $0x78] sm:$0xff]
        %v712 = vld [vmem:[%s464 + $0x80] sm:$0xff]
        %v713 = vld [vmem:[%s464 + $0x88] sm:$0xff]
        %v714 = vld [vmem:[%s464 + $0x90] sm:$0xff]
        %v715 = vld [vmem:[%s464 + $0x98] sm:$0xff]
        %v716 = vld [vmem:[%s464 + $0xa0] sm:$0xff]
        %v717 = vld [vmem:[%s464 + $0xa8] sm:$0xff]
        %v718 = vld [vmem:[%s464 + $0xb0] sm:$0xff]
        %v719 = vld [vmem:[%s464 + $0xb8] sm:$0xff]
        %v720 = vld [vmem:[%s464 + $0xc0] sm:$0xff]
        %v721 = vld [vmem:[%s464 + $0xc8] sm:$0xff]
        %v722 = vld [vmem:[%s464 + $0xd0] sm:$0xff]
        %v723 = vld [vmem:[%s464 + $0xd8] sm:$0xff]
        %v724 = vld [vmem:[%s464 + $0xe0] sm:$0xff]
        %v725 = vld [vmem:[%s464 + $0xe8] sm:$0xff]
        %v726 = vld [vmem:[%s464 + $0xf0] sm:$0xff]
        %v727 = vld [vmem:[%s464 + $0xf8] sm:$0xff]
        %v728 = vld [vmem:[%s468] sm:$0x3]
        %v729 = vld [vmem:[%s473] sm:$0xff]
        %v730 = vld [vmem:[%s473 + $0x8] sm:$0xff]
        %v731 = vld [vmem:[%s473 + $0x10] sm:$0xff]
        %v732 = vld [vmem:[%s473 + $0x18] sm:$0xff]
        %v733 = vld [vmem:[%s473 + $0x20] sm:$0xff]
        %v734 = vld [vmem:[%s473 + $0x28] sm:$0xff]
        %v735 = vld [vmem:[%s473 + $0x30] sm:$0xff]
        %v736 = vld [vmem:[%s473 + $0x38] sm:$0xff]
        %v737 = vld [vmem:[%s473 + $0x40] sm:$0xff]
        %v738 = vld [vmem:[%s473 + $0x48] sm:$0xff]
        %v739 = vld [vmem:[%s473 + $0x50] sm:$0xff]
        %v740 = vld [vmem:[%s473 + $0x58] sm:$0xff]
        %v741 = vld [vmem:[%s473 + $0x60] sm:$0xff]
        %v742 = vld [vmem:[%s473 + $0x68] sm:$0xff]
        %v743 = vld [vmem:[%s473 + $0x70] sm:$0xff]
        %v744 = vld [vmem:[%s473 + $0x78] sm:$0xff]
        %v745 = vld [vmem:[%s473 + $0x80] sm:$0xff]
        %v746 = vld [vmem:[%s473 + $0x88] sm:$0xff]
        %v747 = vld [vmem:[%s473 + $0x90] sm:$0xff]
        %v748 = vld [vmem:[%s473 + $0x98] sm:$0xff]
        %v749 = vld [vmem:[%s473 + $0xa0] sm:$0xff]
        %v750 = vld [vmem:[%s473 + $0xa8] sm:$0xff]
        %v751 = vld [vmem:[%s473 + $0xb0] sm:$0xff]
        %v752 = vld [vmem:[%s473 + $0xb8] sm:$0xff]
        %v753 = vld [vmem:[%s473 + $0xc0] sm:$0xff]
        %v754 = vld [vmem:[%s473 + $0xc8] sm:$0xff]
        %v755 = vld [vmem:[%s473 + $0xd0] sm:$0xff]
        %v756 = vld [vmem:[%s473 + $0xd8] sm:$0xff]
        %v757 = vld [vmem:[%s473 + $0xe0] sm:$0xff]
        %v758 = vld [vmem:[%s473 + $0xe8] sm:$0xff]
        %v759 = vld [vmem:[%s473 + $0xf0] sm:$0xff]
        %v760 = vld [vmem:[%s473 + $0xf8] sm:$0xff]
        %v761 = vld [vmem:[%s476] sm:$0x1]
        %v762 = vld [vmem:[#allocation2] sm:$0xff]
        %v763 = vld [vmem:[#allocation2 + $0x8] sm:$0xff]
        %764 = vmatpush.msra.mxu0 %v501
        %765 = vmatpush.msra.mxu0 %v500
        %766 = vmatpush.msra.mxu0 %v499
        %767 = vmatpush.msra.mxu0 %v498
        %768 = vmatpush.msra.mxu0 %v497
        %769 = vmatpush.msra.mxu0 %v496
        %770 = vmatpush.msra.mxu0 %v495
        %771 = vmatpush.msra.mxu0 %v494
        %772 = vmatpush.msra.mxu0 %v493
        %773 = vmatpush.msra.mxu0 %v492
        %774 = vmatpush.msra.mxu0 %v491
        %775 = vmatpush.msra.mxu0 %v490
        %776 = vmatpush.msra.mxu0 %v489
        %777 = vmatpush.msra.mxu0 %v488
        %778 = vmatpush.msra.mxu0 %v487
        %779 = vmatpush.msra.mxu0 %v486
        %780 = vmatmul.f32.gmra.mxu0 %v762
        %v781 = vpop.f32.mrf.mxu0
        %v782 = vadd.f32 0.0, %v781
        %783 = vdwg.mxu0
        %784 = vmatpush.msra.mxu0 %v517
        %785 = vmatpush.msra.mxu0 %v516
        %786 = vmatpush.msra.mxu0 %v515
        %787 = vmatpush.msra.mxu0 %v514
        %788 = vmatpush.msra.mxu0 %v513
        %789 = vmatpush.msra.mxu0 %v512
        %790 = vmatpush.msra.mxu0 %v511
        %791 = vmatpush.msra.mxu0 %v510
        %792 = vmatpush.msra.mxu0 %v509
        %793 = vmatpush.msra.mxu0 %v508
        %794 = vmatpush.msra.mxu0 %v507
        %795 = vmatpush.msra.mxu0 %v506
        %796 = vmatpush.msra.mxu0 %v505
        %797 = vmatpush.msra.mxu0 %v504
        %798 = vmatpush.msra.mxu0 %v503
        %799 = vmatpush.msra.mxu0 %v502
        %800 = vmatmul.f32.gmra.mxu0 %v762
        %v801 = vpop.f32.mrf.mxu0
        %v802 = vadd.f32 0.0, %v801
        %803 = vdwg.mxu0
        %804 = vmatpush.msra.mxu0 %v533
        %805 = vmatpush.msra.mxu0 %v532
        %806 = vmatpush.msra.mxu0 %v531
        %807 = vmatpush.msra.mxu0 %v530
        %808 = vmatpush.msra.mxu0 %v529
        %809 = vmatpush.msra.mxu0 %v528
        %810 = vmatpush.msra.mxu0 %v527
        %811 = vmatpush.msra.mxu0 %v526
        %812 = vmatpush.msra.mxu0 %v525
        %813 = vmatpush.msra.mxu0 %v524
        %814 = vmatpush.msra.mxu0 %v523
        %815 = vmatpush.msra.mxu0 %v522
        %816 = vmatpush.msra.mxu0 %v521
        %817 = vmatpush.msra.mxu0 %v520
        %818 = vmatpush.msra.mxu0 %v519
        %819 = vmatpush.msra.mxu0 %v518
        %820 = vmatmul.f32.gmra.mxu0 %v762
        %v821 = vpop.f32.mrf.mxu0
        %v822 = vadd.f32 0.0, %v821
        %823 = vdwg.mxu0
        %824 = vmatpush.msra.mxu0 %v549
        %825 = vmatpush.msra.mxu0 %v548
        %826 = vmatpush.msra.mxu0 %v547
        %827 = vmatpush.msra.mxu0 %v546
        %828 = vmatpush.msra.mxu0 %v545
        %829 = vmatpush.msra.mxu0 %v544
        %830 = vmatpush.msra.mxu0 %v543
        %831 = vmatpush.msra.mxu0 %v542
        %832 = vmatpush.msra.mxu0 %v541
        %833 = vmatpush.msra.mxu0 %v540
        %834 = vmatpush.msra.mxu0 %v539
        %835 = vmatpush.msra.mxu0 %v538
        %836 = vmatpush.msra.mxu0 %v537
        %837 = vmatpush.msra.mxu0 %v536
        %838 = vmatpush.msra.mxu0 %v535
        %839 = vmatpush.msra.mxu0 %v534
        %840 = vmatmul.f32.gmra.mxu0 %v762
        %v841 = vpop.f32.mrf.mxu0
        %v842 = vadd.f32 0.0, %v841
        %843 = vdwg.mxu0
        %844 = vmatpush.msra.mxu0 %v565
        %845 = vmatpush.msra.mxu0 %v564
        %846 = vmatpush.msra.mxu0 %v563
        %847 = vmatpush.msra.mxu0 %v562
        %848 = vmatpush.msra.mxu0 %v561
        %849 = vmatpush.msra.mxu0 %v560
        %850 = vmatpush.msra.mxu0 %v559
        %851 = vmatpush.msra.mxu0 %v558
        %852 = vmatpush.msra.mxu0 %v557
        %853 = vmatpush.msra.mxu0 %v556
        %854 = vmatpush.msra.mxu0 %v555
        %855 = vmatpush.msra.mxu0 %v554
        %856 = vmatpush.msra.mxu0 %v553
        %857 = vmatpush.msra.mxu0 %v552
        %858 = vmatpush.msra.mxu0 %v551
        %859 = vmatpush.msra.mxu0 %v550
        %860 = vmatmul.f32.gmra.mxu0 %v762
        %v861 = vpop.f32.mrf.mxu0
        %v862 = vadd.f32 0.0, %v861
        %863 = vdwg.mxu0
        %864 = vmatpush.msra.mxu0 %v581
        %865 = vmatpush.msra.mxu0 %v580
        %866 = vmatpush.msra.mxu0 %v579
        %867 = vmatpush.msra.mxu0 %v578
        %868 = vmatpush.msra.mxu0 %v577
        %869 = vmatpush.msra.mxu0 %v576
        %870 = vmatpush.msra.mxu0 %v575
        %871 = vmatpush.msra.mxu0 %v574
        %872 = vmatpush.msra.mxu0 %v573
        %873 = vmatpush.msra.mxu0 %v572
        %874 = vmatpush.msra.mxu0 %v571
        %875 = vmatpush.msra.mxu0 %v570
        %876 = vmatpush.msra.mxu0 %v569
        %877 = vmatpush.msra.mxu0 %v568
        %878 = vmatpush.msra.mxu0 %v567
        %879 = vmatpush.msra.mxu0 %v566
        %880 = vmatmul.f32.gmra.mxu0 %v762
        %v881 = vpop.f32.mrf.mxu0
        %v882 = vadd.f32 0.0, %v881
        %883 = vdwg.mxu0
        %884 = vmatpush.msra.mxu0 %v597
        %885 = vmatpush.msra.mxu0 %v596
        %886 = vmatpush.msra.mxu0 %v595
        %887 = vmatpush.msra.mxu0 %v594
        %888 = vmatpush.msra.mxu0 %v593
        %889 = vmatpush.msra.mxu0 %v592
        %890 = vmatpush.msra.mxu0 %v591
        %891 = vmatpush.msra.mxu0 %v590
        %892 = vmatpush.msra.mxu0 %v589
        %893 = vmatpush.msra.mxu0 %v588
        %894 = vmatpush.msra.mxu0 %v587
        %895 = vmatpush.msra.mxu0 %v586
        %896 = vmatpush.msra.mxu0 %v585
        %897 = vmatpush.msra.mxu0 %v584
        %898 = vmatpush.msra.mxu0 %v583
        %899 = vmatpush.msra.mxu0 %v582
        %900 = vmatmul.f32.gmra.mxu0 %v762
        %v901 = vpop.f32.mrf.mxu0
        %v902 = vadd.f32 0.0, %v901
        %903 = vdwg.mxu0
        %904 = vmatpush.msra.mxu0 %v613
        %905 = vmatpush.msra.mxu0 %v612
        %906 = vmatpush.msra.mxu0 %v611
        %907 = vmatpush.msra.mxu0 %v610
        %908 = vmatpush.msra.mxu0 %v609
        %909 = vmatpush.msra.mxu0 %v608
        %910 = vmatpush.msra.mxu0 %v607
        %911 = vmatpush.msra.mxu0 %v606
        %912 = vmatpush.msra.mxu0 %v605
        %913 = vmatpush.msra.mxu0 %v604
        %914 = vmatpush.msra.mxu0 %v603
        %915 = vmatpush.msra.mxu0 %v602
        %916 = vmatpush.msra.mxu0 %v601
        %917 = vmatpush.msra.mxu0 %v600
        %918 = vmatpush.msra.mxu0 %v599
        %919 = vmatpush.msra.mxu0 %v598
        %920 = vmatmul.f32.gmra.mxu0 %v762
        %v921 = vpop.f32.mrf.mxu0
        %v922 = vadd.f32 0.0, %v921
        %923 = vdwg.mxu0
        %924 = vmatpush.msra.mxu0 %v629
        %925 = vmatpush.msra.mxu0 %v628
        %926 = vmatpush.msra.mxu0 %v627
        %927 = vmatpush.msra.mxu0 %v626
        %928 = vmatpush.msra.mxu0 %v625
        %929 = vmatpush.msra.mxu0 %v624
        %930 = vmatpush.msra.mxu0 %v623
        %931 = vmatpush.msra.mxu0 %v622
        %932 = vmatpush.msra.mxu0 %v621
        %933 = vmatpush.msra.mxu0 %v620
        %934 = vmatpush.msra.mxu0 %v619
        %935 = vmatpush.msra.mxu0 %v618
        %936 = vmatpush.msra.mxu0 %v617
        %937 = vmatpush.msra.mxu0 %v616
        %938 = vmatpush.msra.mxu0 %v615
        %939 = vmatpush.msra.mxu0 %v614
        %940 = vmatmul.f32.gmra.mxu0 %v762
        %v941 = vpop.f32.mrf.mxu0
        %v942 = vadd.f32 0.0, %v941
        %943 = vdwg.mxu0
        %944 = vmatpush.msra.mxu0 %v645
        %945 = vmatpush.msra.mxu0 %v644
        %946 = vmatpush.msra.mxu0 %v643
        %947 = vmatpush.msra.mxu0 %v642
        %948 = vmatpush.msra.mxu0 %v641
        %949 = vmatpush.msra.mxu0 %v640
        %950 = vmatpush.msra.mxu0 %v639
        %951 = vmatpush.msra.mxu0 %v638
        %952 = vmatpush.msra.mxu0 %v637
        %953 = vmatpush.msra.mxu0 %v636
        %954 = vmatpush.msra.mxu0 %v635
        %955 = vmatpush.msra.mxu0 %v634
        %956 = vmatpush.msra.mxu0 %v633
        %957 = vmatpush.msra.mxu0 %v632
        %958 = vmatpush.msra.mxu0 %v631
        %959 = vmatpush.msra.mxu0 %v630
        %960 = vmatmul.f32.gmra.mxu0 %v762
        %v961 = vpop.f32.mrf.mxu0
        %v962 = vadd.f32 0.0, %v961
        %963 = vdwg.mxu0
        %964 = vmatpush.msra.mxu0 %v661
        %965 = vmatpush.msra.mxu0 %v660
        %966 = vmatpush.msra.mxu0 %v659
        %967 = vmatpush.msra.mxu0 %v658
        %968 = vmatpush.msra.mxu0 %v657
        %969 = vmatpush.msra.mxu0 %v656
        %970 = vmatpush.msra.mxu0 %v655
        %971 = vmatpush.msra.mxu0 %v654
        %972 = vmatpush.msra.mxu0 %v653
        %973 = vmatpush.msra.mxu0 %v652
        %974 = vmatpush.msra.mxu0 %v651
        %975 = vmatpush.msra.mxu0 %v650
        %976 = vmatpush.msra.mxu0 %v649
        %977 = vmatpush.msra.mxu0 %v648
        %978 = vmatpush.msra.mxu0 %v647
        %979 = vmatpush.msra.mxu0 %v646
        %980 = vmatmul.f32.gmra.mxu0 %v762
        %v981 = vpop.f32.mrf.mxu0
        %v982 = vadd.f32 0.0, %v981
        %983 = vdwg.mxu0
        %984 = vmatpush.msra.mxu0 %v677
        %985 = vmatpush.msra.mxu0 %v676
        %986 = vmatpush.msra.mxu0 %v675
        %987 = vmatpush.msra.mxu0 %v674
        %988 = vmatpush.msra.mxu0 %v673
        %989 = vmatpush.msra.mxu0 %v672
        %990 = vmatpush.msra.mxu0 %v671
        %991 = vmatpush.msra.mxu0 %v670
        %992 = vmatpush.msra.mxu0 %v669
        %993 = vmatpush.msra.mxu0 %v668
        %994 = vmatpush.msra.mxu0 %v667
        %995 = vmatpush.msra.mxu0 %v666
        %996 = vmatpush.msra.mxu0 %v665
        %997 = vmatpush.msra.mxu0 %v664
        %998 = vmatpush.msra.mxu0 %v663
        %999 = vmatpush.msra.mxu0 %v662
        %1000 = vmatmul.f32.gmra.mxu0 %v762
        %v1001 = vpop.f32.mrf.mxu0
        %v1002 = vadd.f32 0.0, %v1001
        %1003 = vdwg.mxu0
        %vm1004 = vcmask 261120
        %v1006 = vsel %vm1004, %v782, 0
        %v1009 = vsel %vm1004, %v862, 0
        %1011 = vmatpush.xpose.msra.mxu0 0.0
        %1012 = vmatpush.xpose.msra.mxu0 0.0
        %1013 = vmatpush.xpose.msra.mxu0 0.0
        %1014 = vmatpush.xpose.msra.mxu0 0.0
        %1015 = vmatpush.xpose.msra.mxu0 0.0
        %1016 = vmatpush.xpose.msra.mxu0 0.0
        %1017 = vmatpush.xpose.msra.mxu0 0.0
        %1018 = vmatpush.xpose.msra.mxu0 0.0
        %1019 = vmatpush.xpose.msra.mxu0 0.0
        %1020 = vmatpush.xpose.msra.mxu0 0.0
        %1021 = vmatpush.xpose.msra.mxu0 0.0
        %1022 = vmatpush.xpose.msra.mxu0 0.0
        %1023 = vmatpush.xpose.msra.mxu0 0.0
        %1024 = vmatpush.xpose.msra.mxu0 0.0
        %1025 = vmatpush.xpose.msra.mxu0 0.0
        %1026 = vmatpush.xpose.msra.mxu0 %v1009
        %1027 = vmatmul.f32.gmra.mxu0 %v1006
        %v1028 = vpop.f32.mrf.mxu0
        %v1029 = vadd.f32 0.0, %v1028
        %1030 = vdwg.mxu0
        %v1032 = vsel %vm1004, %v802, 0
        %v1035 = vsel %vm1004, %v882, 0
        %1037 = vmatpush.xpose.msra.mxu0 0.0
        %1038 = vmatpush.xpose.msra.mxu0 0.0
        %1039 = vmatpush.xpose.msra.mxu0 0.0
        %1040 = vmatpush.xpose.msra.mxu0 0.0
        %1041 = vmatpush.xpose.msra.mxu0 0.0
        %1042 = vmatpush.xpose.msra.mxu0 0.0
        %1043 = vmatpush.xpose.msra.mxu0 0.0
        %1044 = vmatpush.xpose.msra.mxu0 0.0
        %1045 = vmatpush.xpose.msra.mxu0 0.0
        %1046 = vmatpush.xpose.msra.mxu0 0.0
        %1047 = vmatpush.xpose.msra.mxu0 0.0
        %1048 = vmatpush.xpose.msra.mxu0 0.0
        %1049 = vmatpush.xpose.msra.mxu0 0.0
        %1050 = vmatpush.xpose.msra.mxu0 0.0
        %1051 = vmatpush.xpose.msra.mxu0 0.0
        %1052 = vmatpush.xpose.msra.mxu0 %v1035
        %1053 = vmatmul.f32.gmra.mxu0 %v1032
        %v1054 = vpop.f32.mrf.mxu0
        %v1055 = vadd.f32 0.0, %v1054
        %1056 = vdwg.mxu0
        %v1058 = vsel %vm1004, %v822, 0
        %v1061 = vsel %vm1004, %v902, 0
        %1063 = vmatpush.xpose.msra.mxu0 0.0
        %1064 = vmatpush.xpose.msra.mxu0 0.0
        %1065 = vmatpush.xpose.msra.mxu0 0.0
        %1066 = vmatpush.xpose.msra.mxu0 0.0
        %1067 = vmatpush.xpose.msra.mxu0 0.0
        %1068 = vmatpush.xpose.msra.mxu0 0.0
        %1069 = vmatpush.xpose.msra.mxu0 0.0
        %1070 = vmatpush.xpose.msra.mxu0 0.0
        %1071 = vmatpush.xpose.msra.mxu0 0.0
        %1072 = vmatpush.xpose.msra.mxu0 0.0
        %1073 = vmatpush.xpose.msra.mxu0 0.0
        %1074 = vmatpush.xpose.msra.mxu0 0.0
        %1075 = vmatpush.xpose.msra.mxu0 0.0
        %1076 = vmatpush.xpose.msra.mxu0 0.0
        %1077 = vmatpush.xpose.msra.mxu0 0.0
        %1078 = vmatpush.xpose.msra.mxu0 %v1061
        %1079 = vmatmul.f32.gmra.mxu0 %v1058
        %v1080 = vpop.f32.mrf.mxu0
        %v1081 = vadd.f32 0.0, %v1080
        %1082 = vdwg.mxu0
        %v1084 = vsel %vm1004, %v842, 0
        %v1087 = vsel %vm1004, %v922, 0
        %1089 = vmatpush.xpose.msra.mxu0 0.0
        %1090 = vmatpush.xpose.msra.mxu0 0.0
        %1091 = vmatpush.xpose.msra.mxu0 0.0
        %1092 = vmatpush.xpose.msra.mxu0 0.0
        %1093 = vmatpush.xpose.msra.mxu0 0.0
        %1094 = vmatpush.xpose.msra.mxu0 0.0
        %1095 = vmatpush.xpose.msra.mxu0 0.0
        %1096 = vmatpush.xpose.msra.mxu0 0.0
        %1097 = vmatpush.xpose.msra.mxu0 0.0
        %1098 = vmatpush.xpose.msra.mxu0 0.0
        %1099 = vmatpush.xpose.msra.mxu0 0.0
        %1100 = vmatpush.xpose.msra.mxu0 0.0
        %1101 = vmatpush.xpose.msra.mxu0 0.0
        %1102 = vmatpush.xpose.msra.mxu0 0.0
        %1103 = vmatpush.xpose.msra.mxu0 0.0
        %1104 = vmatpush.xpose.msra.mxu0 %v1087
        %1105 = vmatmul.f32.gmra.mxu0 %v1084
        %v1106 = vpop.f32.mrf.mxu0
        %v1107 = vadd.f32 0.0, %v1106
        %1108 = vdwg.mxu0
        %v1109 = vmul.f32 %v1029, 0.17677669
        %v1110 = vmul.f32 %v1055, 0.17677669
        %v1111 = vmul.f32 %v1081, 0.17677669
        %v1112 = vmul.f32 %v1107, 0.17677669
        %vm1113 = vcmask 64512
        %v1114 = vsel %vm1113, %v1109, -inf
        %1115 = vmax.xlane.f32.xlu0 %v1114
        %v1116 = vpop.xlane.xlu0 %1115
        %v1117 = vsel %vm1113, %v1110, -inf
        %1118 = vmax.xlane.f32.xlu0 %v1117
        %v1119 = vpop.xlane.xlu0 %1118
        %v1120 = vsel %vm1113, %v1111, -inf
        %1121 = vmax.xlane.f32.xlu0 %v1120
        %v1122 = vpop.xlane.xlu0 %1121
        %v1123 = vsel %vm1113, %v1112, -inf
        %1124 = vmax.xlane.f32.xlu0 %v1123
        %v1125 = vpop.xlane.xlu0 %1124
        %v1126 = vsub.f32 %v1109, %v1116
        %v1127 = vsub.f32 %v1110, %v1119
        %v1128 = vsub.f32 %v1111, %v1122
        %v1129 = vsub.f32 %v1112, %v1125
        %v1130 = vmul.f32 %v1126, 1.442695
        %v1131 = vpow.pop %v1130
        %v1132 = vmul.f32 %v1127, 1.442695
        %v1133 = vpow.pop %v1132
        %v1134 = vmul.f32 %v1128, 1.442695
        %v1135 = vpow.pop %v1134
        %v1136 = vmul.f32 %v1129, 1.442695
        %v1137 = vpow.pop %v1136
        %v1138 = vsel %vm1113, %v1131, 0.0
        %1139 = vadd.xlane.f32.xlu0 %v1138
        %v1140 = vpop.xlane.xlu0 %1139
        %v1141 = vsel %vm1113, %v1133, 0.0
        %1142 = vadd.xlane.f32.xlu0 %v1141
        %v1143 = vpop.xlane.xlu0 %1142
        %v1144 = vsel %vm1113, %v1135, 0.0
        %1145 = vadd.xlane.f32.xlu0 %v1144
        %v1146 = vpop.xlane.xlu0 %1145
        %v1147 = vsel %vm1113, %v1137, 0.0
        %1148 = vadd.xlane.f32.xlu0 %v1147
        %v1149 = vpop.xlane.xlu0 %1148
        %v1150 = vrcp.pop %v1140
        %v1151 = vrcp.pop %v1143
        %v1152 = vrcp.pop %v1146
        %v1153 = vrcp.pop %v1149
        %v1154 = vmul.f32 %v1131, %v1150
        %v1155 = vmul.f32 %v1133, %v1151
        %v1156 = vmul.f32 %v1135, %v1152
        %v1157 = vmul.f32 %v1137, %v1153
        %v1159 = vsel %vm1113, %v1154, 0
        %1161 = vmatpush.msra.mxu0 0.0
        %1162 = vmatpush.msra.mxu0 0.0
        %1163 = vmatpush.msra.mxu0 0.0
        %1164 = vmatpush.msra.mxu0 0.0
        %1165 = vmatpush.msra.mxu0 0.0
        %1166 = vmatpush.msra.mxu0 0.0
        %1167 = vmatpush.msra.mxu0 0.0
        %1168 = vmatpush.msra.mxu0 0.0
        %1169 = vmatpush.msra.mxu0 0.0
        %1170 = vmatpush.msra.mxu0 0.0
        %1171 = vmatpush.msra.mxu0 0.0
        %1172 = vmatpush.msra.mxu0 0.0
        %1173 = vmatpush.msra.mxu0 0.0
        %1174 = vmatpush.msra.mxu0 0.0
        %1175 = vmatpush.msra.mxu0 0.0
        %1176 = vmatpush.msra.mxu0 %v942
        %1177 = vmatmul.f32.gmra.mxu0 %v1159
        %v1178 = vpop.f32.mrf.mxu0
        %v1179 = vadd.f32 0.0, %v1178
        %1180 = vdwg.mxu0
        %v1182 = vsel %vm1113, %v1155, 0
        %1184 = vmatpush.msra.mxu0 0.0
        %1185 = vmatpush.msra.mxu0 0.0
        %1186 = vmatpush.msra.mxu0 0.0
        %1187 = vmatpush.msra.mxu0 0.0
        %1188 = vmatpush.msra.mxu0 0.0
        %1189 = vmatpush.msra.mxu0 0.0
        %1190 = vmatpush.msra.mxu0 0.0
        %1191 = vmatpush.msra.mxu0 0.0
        %1192 = vmatpush.msra.mxu0 0.0
        %1193 = vmatpush.msra.mxu0 0.0
        %1194 = vmatpush.msra.mxu0 0.0
        %1195 = vmatpush.msra.mxu0 0.0
        %1196 = vmatpush.msra.mxu0 0.0
        %1197 = vmatpush.msra.mxu0 0.0
        %1198 = vmatpush.msra.mxu0 0.0
        %1199 = vmatpush.msra.mxu0 %v962
        %1200 = vmatmul.f32.gmra.mxu0 %v1182
        %v1201 = vpop.f32.mrf.mxu0
        %v1202 = vadd.f32 0.0, %v1201
        %1203 = vdwg.mxu0
        %v1205 = vsel %vm1113, %v1156, 0
        %1207 = vmatpush.msra.mxu0 0.0
        %1208 = vmatpush.msra.mxu0 0.0
        %1209 = vmatpush.msra.mxu0 0.0
        %1210 = vmatpush.msra.mxu0 0.0
        %1211 = vmatpush.msra.mxu0 0.0
        %1212 = vmatpush.msra.mxu0 0.0
        %1213 = vmatpush.msra.mxu0 0.0
        %1214 = vmatpush.msra.mxu0 0.0
        %1215 = vmatpush.msra.mxu0 0.0
        %1216 = vmatpush.msra.mxu0 0.0
        %1217 = vmatpush.msra.mxu0 0.0
        %1218 = vmatpush.msra.mxu0 0.0
        %1219 = vmatpush.msra.mxu0 0.0
        %1220 = vmatpush.msra.mxu0 0.0
        %1221 = vmatpush.msra.mxu0 0.0
        %1222 = vmatpush.msra.mxu0 %v982
        %1223 = vmatmul.f32.gmra.mxu0 %v1205
        %v1224 = vpop.f32.mrf.mxu0
        %v1225 = vadd.f32 0.0, %v1224
        %1226 = vdwg.mxu0
        %v1228 = vsel %vm1113, %v1157, 0
        %1230 = vmatpush.msra.mxu0 0.0
        %1231 = vmatpush.msra.mxu0 0.0
        %1232 = vmatpush.msra.mxu0 0.0
        %1233 = vmatpush.msra.mxu0 0.0
        %1234 = vmatpush.msra.mxu0 0.0
        %1235 = vmatpush.msra.mxu0 0.0
        %1236 = vmatpush.msra.mxu0 0.0
        %1237 = vmatpush.msra.mxu0 0.0
        %1238 = vmatpush.msra.mxu0 0.0
        %1239 = vmatpush.msra.mxu0 0.0
        %1240 = vmatpush.msra.mxu0 0.0
        %1241 = vmatpush.msra.mxu0 0.0
        %1242 = vmatpush.msra.mxu0 0.0
        %1243 = vmatpush.msra.mxu0 0.0
        %1244 = vmatpush.msra.mxu0 0.0
        %1245 = vmatpush.msra.mxu0 %v1002
        %1246 = vmatmul.f32.gmra.mxu0 %v1228
        %v1247 = vpop.f32.mrf.mxu0
        %v1248 = vadd.f32 0.0, %v1247
        %1249 = vdwg.mxu0
        %v1251 = vsel %vm1004, %v1179, 0
        %1253 = vmatpush.msra.mxu0 0.0
        %1254 = vmatpush.msra.mxu0 0.0
        %1255 = vmatpush.msra.mxu0 0.0
        %1256 = vmatpush.msra.mxu0 0.0
        %1257 = vmatpush.msra.mxu0 0.0
        %1258 = vmatpush.msra.mxu0 0.0
        %1259 = vmatpush.msra.mxu0 0.0
        %1260 = vmatpush.msra.mxu0 0.0
        %1261 = vmatpush.msra.mxu0 0.0
        %1262 = vmatpush.msra.mxu0 0.0
        %1263 = vmatpush.msra.mxu0 0.0
        %1264 = vmatpush.msra.mxu0 0.0
        %1265 = vmatpush.msra.mxu0 %v681
        %1266 = vmatpush.msra.mxu0 %v680
        %1267 = vmatpush.msra.mxu0 %v679
        %1268 = vmatpush.msra.mxu0 %v678
        %1269 = vmatmul.f32.gmra.mxu0 %v1251
        %v1270 = vpop.f32.mrf.mxu0
        %v1271 = vadd.f32 0.0, %v1270
        %1272 = vdwg.mxu0
        %v1274 = vsel %vm1004, %v1202, 0
        %1276 = vmatpush.msra.mxu0 0.0
        %1277 = vmatpush.msra.mxu0 0.0
        %1278 = vmatpush.msra.mxu0 0.0
        %1279 = vmatpush.msra.mxu0 0.0
        %1280 = vmatpush.msra.mxu0 0.0
        %1281 = vmatpush.msra.mxu0 0.0
        %1282 = vmatpush.msra.mxu0 0.0
        %1283 = vmatpush.msra.mxu0 0.0
        %1284 = vmatpush.msra.mxu0 0.0
        %1285 = vmatpush.msra.mxu0 0.0
        %1286 = vmatpush.msra.mxu0 0.0
        %1287 = vmatpush.msra.mxu0 0.0
        %1288 = vmatpush.msra.mxu0 %v685
        %1289 = vmatpush.msra.mxu0 %v684
        %1290 = vmatpush.msra.mxu0 %v683
        %1291 = vmatpush.msra.mxu0 %v682
        %1292 = vmatmul.f32.gmra.mxu0 %v1274
        %v1293 = vpop.f32.mrf.mxu0
        %v1294 = vadd.f32 0.0, %v1293
        %1295 = vdwg.mxu0
        %v1297 = vsel %vm1004, %v1225, 0
        %1299 = vmatpush.msra.mxu0 0.0
        %1300 = vmatpush.msra.mxu0 0.0
        %1301 = vmatpush.msra.mxu0 0.0
        %1302 = vmatpush.msra.mxu0 0.0
        %1303 = vmatpush.msra.mxu0 0.0
        %1304 = vmatpush.msra.mxu0 0.0
        %1305 = vmatpush.msra.mxu0 0.0
        %1306 = vmatpush.msra.mxu0 0.0
        %1307 = vmatpush.msra.mxu0 0.0
        %1308 = vmatpush.msra.mxu0 0.0
        %1309 = vmatpush.msra.mxu0 0.0
        %1310 = vmatpush.msra.mxu0 0.0
        %1311 = vmatpush.msra.mxu0 %v689
        %1312 = vmatpush.msra.mxu0 %v688
        %1313 = vmatpush.msra.mxu0 %v687
        %1314 = vmatpush.msra.mxu0 %v686
        %1315 = vmatmul.f32.gmra.mxu0 %v1297
        %v1316 = vpop.f32.mrf.mxu0
        %v1317 = vadd.f32 0.0, %v1316
        %1318 = vdwg.mxu0
        %v1320 = vsel %vm1004, %v1248, 0
        %1322 = vmatpush.msra.mxu0 0.0
        %1323 = vmatpush.msra.mxu0 0.0
        %1324 = vmatpush.msra.mxu0 0.0
        %1325 = vmatpush.msra.mxu0 0.0
        %1326 = vmatpush.msra.mxu0 0.0
        %1327 = vmatpush.msra.mxu0 0.0
        %1328 = vmatpush.msra.mxu0 0.0
        %1329 = vmatpush.msra.mxu0 0.0
        %1330 = vmatpush.msra.mxu0 0.0
        %1331 = vmatpush.msra.mxu0 0.0
        %1332 = vmatpush.msra.mxu0 0.0
        %1333 = vmatpush.msra.mxu0 0.0
        %1334 = vmatpush.msra.mxu0 %v693
        %1335 = vmatpush.msra.mxu0 %v692
        %1336 = vmatpush.msra.mxu0 %v691
        %1337 = vmatpush.msra.mxu0 %v690
        %1338 = vmatmul.f32.gmra.mxu0 %v1320
        %v1339 = vpop.f32.mrf.mxu0
        %v1340 = vadd.f32 0.0, %v1339
        %1341 = vdwg.mxu0
        %v1342 = vadd.f32 %v1271, %v1294
        %v1343 = vadd.f32 %v1342, %v1317
        %v1344 = vadd.f32 %v1343, %v1340
        %v1345 = vadd.f32 %v762, %v1344
        %1346 = vmatpush.msra.mxu0 %v501
        %1347 = vmatpush.msra.mxu0 %v500
        %1348 = vmatpush.msra.mxu0 %v499
        %1349 = vmatpush.msra.mxu0 %v498
        %1350 = vmatpush.msra.mxu0 %v497
        %1351 = vmatpush.msra.mxu0 %v496
        %1352 = vmatpush.msra.mxu0 %v495
        %1353 = vmatpush.msra.mxu0 %v494
        %1354 = vmatpush.msra.mxu0 %v493
        %1355 = vmatpush.msra.mxu0 %v492
        %1356 = vmatpush.msra.mxu0 %v491
        %1357 = vmatpush.msra.mxu0 %v490
        %1358 = vmatpush.msra.mxu0 %v489
        %1359 = vmatpush.msra.mxu0 %v488
        %1360 = vmatpush.msra.mxu0 %v487
        %1361 = vmatpush.msra.mxu0 %v486
        %1362 = vmatmul.f32.gmra.mxu0 %v763
        %v1363 = vpop.f32.mrf.mxu0
        %v1364 = vadd.f32 0.0, %v1363
        %1365 = vdwg.mxu0
        %1366 = vmatpush.msra.mxu0 %v517
        %1367 = vmatpush.msra.mxu0 %v516
        %1368 = vmatpush.msra.mxu0 %v515
        %1369 = vmatpush.msra.mxu0 %v514
        %1370 = vmatpush.msra.mxu0 %v513
        %1371 = vmatpush.msra.mxu0 %v512
        %1372 = vmatpush.msra.mxu0 %v511
        %1373 = vmatpush.msra.mxu0 %v510
        %1374 = vmatpush.msra.mxu0 %v509
        %1375 = vmatpush.msra.mxu0 %v508
        %1376 = vmatpush.msra.mxu0 %v507
        %1377 = vmatpush.msra.mxu0 %v506
        %1378 = vmatpush.msra.mxu0 %v505
        %1379 = vmatpush.msra.mxu0 %v504
        %1380 = vmatpush.msra.mxu0 %v503
        %1381 = vmatpush.msra.mxu0 %v502
        %1382 = vmatmul.f32.gmra.mxu0 %v763
        %v1383 = vpop.f32.mrf.mxu0
        %v1384 = vadd.f32 0.0, %v1383
        %1385 = vdwg.mxu0
        %1386 = vmatpush.msra.mxu0 %v533
        %1387 = vmatpush.msra.mxu0 %v532
        %1388 = vmatpush.msra.mxu0 %v531
        %1389 = vmatpush.msra.mxu0 %v530
        %1390 = vmatpush.msra.mxu0 %v529
        %1391 = vmatpush.msra.mxu0 %v528
        %1392 = vmatpush.msra.mxu0 %v527
        %1393 = vmatpush.msra.mxu0 %v526
        %1394 = vmatpush.msra.mxu0 %v525
        %1395 = vmatpush.msra.mxu0 %v524
        %1396 = vmatpush.msra.mxu0 %v523
        %1397 = vmatpush.msra.mxu0 %v522
        %1398 = vmatpush.msra.mxu0 %v521
        %1399 = vmatpush.msra.mxu0 %v520
        %1400 = vmatpush.msra.mxu0 %v519
        %1401 = vmatpush.msra.mxu0 %v518
        %1402 = vmatmul.f32.gmra.mxu0 %v763
        %v1403 = vpop.f32.mrf.mxu0
        %v1404 = vadd.f32 0.0, %v1403
        %1405 = vdwg.mxu0
        %1406 = vmatpush.msra.mxu0 %v549
        %1407 = vmatpush.msra.mxu0 %v548
        %1408 = vmatpush.msra.mxu0 %v547
        %1409 = vmatpush.msra.mxu0 %v546
        %1410 = vmatpush.msra.mxu0 %v545
        %1411 = vmatpush.msra.mxu0 %v544
        %1412 = vmatpush.msra.mxu0 %v543
        %1413 = vmatpush.msra.mxu0 %v542
        %1414 = vmatpush.msra.mxu0 %v541
        %1415 = vmatpush.msra.mxu0 %v540
        %1416 = vmatpush.msra.mxu0 %v539
        %1417 = vmatpush.msra.mxu0 %v538
        %1418 = vmatpush.msra.mxu0 %v537
        %1419 = vmatpush.msra.mxu0 %v536
        %1420 = vmatpush.msra.mxu0 %v535
        %1421 = vmatpush.msra.mxu0 %v534
        %1422 = vmatmul.f32.gmra.mxu0 %v763
        %v1423 = vpop.f32.mrf.mxu0
        %v1424 = vadd.f32 0.0, %v1423
        %1425 = vdwg.mxu0
        %1426 = vmatpush.msra.mxu0 %v565
        %1427 = vmatpush.msra.mxu0 %v564
        %1428 = vmatpush.msra.mxu0 %v563
        %1429 = vmatpush.msra.mxu0 %v562
        %1430 = vmatpush.msra.mxu0 %v561
        %1431 = vmatpush.msra.mxu0 %v560
        %1432 = vmatpush.msra.mxu0 %v559
        %1433 = vmatpush.msra.mxu0 %v558
        %1434 = vmatpush.msra.mxu0 %v557
        %1435 = vmatpush.msra.mxu0 %v556
        %1436 = vmatpush.msra.mxu0 %v555
        %1437 = vmatpush.msra.mxu0 %v554
        %1438 = vmatpush.msra.mxu0 %v553
        %1439 = vmatpush.msra.mxu0 %v552
        %1440 = vmatpush.msra.mxu0 %v551
        %1441 = vmatpush.msra.mxu0 %v550
        %1442 = vmatmul.f32.gmra.mxu0 %v763
        %v1443 = vpop.f32.mrf.mxu0
        %v1444 = vadd.f32 0.0, %v1443
        %1445 = vdwg.mxu0
        %1446 = vmatpush.msra.mxu0 %v581
        %1447 = vmatpush.msra.mxu0 %v580
        %1448 = vmatpush.msra.mxu0 %v579
        %1449 = vmatpush.msra.mxu0 %v578
        %1450 = vmatpush.msra.mxu0 %v577
        %1451 = vmatpush.msra.mxu0 %v576
        %1452 = vmatpush.msra.mxu0 %v575
        %1453 = vmatpush.msra.mxu0 %v574
        %1454 = vmatpush.msra.mxu0 %v573
        %1455 = vmatpush.msra.mxu0 %v572
        %1456 = vmatpush.msra.mxu0 %v571
        %1457 = vmatpush.msra.mxu0 %v570
        %1458 = vmatpush.msra.mxu0 %v569
        %1459 = vmatpush.msra.mxu0 %v568
        %1460 = vmatpush.msra.mxu0 %v567
        %1461 = vmatpush.msra.mxu0 %v566
        %1462 = vmatmul.f32.gmra.mxu0 %v763
        %v1463 = vpop.f32.mrf.mxu0
        %v1464 = vadd.f32 0.0, %v1463
        %1465 = vdwg.mxu0
        %1466 = vmatpush.msra.mxu0 %v597
        %1467 = vmatpush.msra.mxu0 %v596
        %1468 = vmatpush.msra.mxu0 %v595
        %1469 = vmatpush.msra.mxu0 %v594
        %1470 = vmatpush.msra.mxu0 %v593
        %1471 = vmatpush.msra.mxu0 %v592
        %1472 = vmatpush.msra.mxu0 %v591
        %1473 = vmatpush.msra.mxu0 %v590
        %1474 = vmatpush.msra.mxu0 %v589
        %1475 = vmatpush.msra.mxu0 %v588
        %1476 = vmatpush.msra.mxu0 %v587
        %1477 = vmatpush.msra.mxu0 %v586
        %1478 = vmatpush.msra.mxu0 %v585
        %1479 = vmatpush.msra.mxu0 %v584
        %1480 = vmatpush.msra.mxu0 %v583
        %1481 = vmatpush.msra.mxu0 %v582
        %1482 = vmatmul.f32.gmra.mxu0 %v763
        %v1483 = vpop.f32.mrf.mxu0
        %v1484 = vadd.f32 0.0, %v1483
        %1485 = vdwg.mxu0
        %1486 = vmatpush.msra.mxu0 %v613
        %1487 = vmatpush.msra.mxu0 %v612
        %1488 = vmatpush.msra.mxu0 %v611
        %1489 = vmatpush.msra.mxu0 %v610
        %1490 = vmatpush.msra.mxu0 %v609
        %1491 = vmatpush.msra.mxu0 %v608
        %1492 = vmatpush.msra.mxu0 %v607
        %1493 = vmatpush.msra.mxu0 %v606
        %1494 = vmatpush.msra.mxu0 %v605
        %1495 = vmatpush.msra.mxu0 %v604
        %1496 = vmatpush.msra.mxu0 %v603
        %1497 = vmatpush.msra.mxu0 %v602
        %1498 = vmatpush.msra.mxu0 %v601
        %1499 = vmatpush.msra.mxu0 %v600
        %1500 = vmatpush.msra.mxu0 %v599
        %1501 = vmatpush.msra.mxu0 %v598
        %1502 = vmatmul.f32.gmra.mxu0 %v763
        %v1503 = vpop.f32.mrf.mxu0
        %v1504 = vadd.f32 0.0, %v1503
        %1505 = vdwg.mxu0
        %1506 = vmatpush.msra.mxu0 %v629
        %1507 = vmatpush.msra.mxu0 %v628
        %1508 = vmatpush.msra.mxu0 %v627
        %1509 = vmatpush.msra.mxu0 %v626
        %1510 = vmatpush.msra.mxu0 %v625
        %1511 = vmatpush.msra.mxu0 %v624
        %1512 = vmatpush.msra.mxu0 %v623
        %1513 = vmatpush.msra.mxu0 %v622
        %1514 = vmatpush.msra.mxu0 %v621
        %1515 = vmatpush.msra.mxu0 %v620
        %1516 = vmatpush.msra.mxu0 %v619
        %1517 = vmatpush.msra.mxu0 %v618
        %1518 = vmatpush.msra.mxu0 %v617
        %1519 = vmatpush.msra.mxu0 %v616
        %1520 = vmatpush.msra.mxu0 %v615
        %1521 = vmatpush.msra.mxu0 %v614
        %1522 = vmatmul.f32.gmra.mxu0 %v763
        %v1523 = vpop.f32.mrf.mxu0
        %v1524 = vadd.f32 0.0, %v1523
        %1525 = vdwg.mxu0
        %1526 = vmatpush.msra.mxu0 %v645
        %1527 = vmatpush.msra.mxu0 %v644
        %1528 = vmatpush.msra.mxu0 %v643
        %1529 = vmatpush.msra.mxu0 %v642
        %1530 = vmatpush.msra.mxu0 %v641
        %1531 = vmatpush.msra.mxu0 %v640
        %1532 = vmatpush.msra.mxu0 %v639
        %1533 = vmatpush.msra.mxu0 %v638
        %1534 = vmatpush.msra.mxu0 %v637
        %1535 = vmatpush.msra.mxu0 %v636
        %1536 = vmatpush.msra.mxu0 %v635
        %1537 = vmatpush.msra.mxu0 %v634
        %1538 = vmatpush.msra.mxu0 %v633
        %1539 = vmatpush.msra.mxu0 %v632
        %1540 = vmatpush.msra.mxu0 %v631
        %1541 = vmatpush.msra.mxu0 %v630
        %1542 = vmatmul.f32.gmra.mxu0 %v763
        %v1543 = vpop.f32.mrf.mxu0
        %v1544 = vadd.f32 0.0, %v1543
        %1545 = vdwg.mxu0
        %1546 = vmatpush.msra.mxu0 %v661
        %1547 = vmatpush.msra.mxu0 %v660
        %1548 = vmatpush.msra.mxu0 %v659
        %1549 = vmatpush.msra.mxu0 %v658
        %1550 = vmatpush.msra.mxu0 %v657
        %1551 = vmatpush.msra.mxu0 %v656
        %1552 = vmatpush.msra.mxu0 %v655
        %1553 = vmatpush.msra.mxu0 %v654
        %1554 = vmatpush.msra.mxu0 %v653
        %1555 = vmatpush.msra.mxu0 %v652
        %1556 = vmatpush.msra.mxu0 %v651
        %1557 = vmatpush.msra.mxu0 %v650
        %1558 = vmatpush.msra.mxu0 %v649
        %1559 = vmatpush.msra.mxu0 %v648
        %1560 = vmatpush.msra.mxu0 %v647
        %1561 = vmatpush.msra.mxu0 %v646
        %1562 = vmatmul.f32.gmra.mxu0 %v763
        %v1563 = vpop.f32.mrf.mxu0
        %v1564 = vadd.f32 0.0, %v1563
        %1565 = vdwg.mxu0
        %1566 = vmatpush.msra.mxu0 %v677
        %1567 = vmatpush.msra.mxu0 %v676
        %1568 = vmatpush.msra.mxu0 %v675
        %1569 = vmatpush.msra.mxu0 %v674
        %1570 = vmatpush.msra.mxu0 %v673
        %1571 = vmatpush.msra.mxu0 %v672
        %1572 = vmatpush.msra.mxu0 %v671
        %1573 = vmatpush.msra.mxu0 %v670
        %1574 = vmatpush.msra.mxu0 %v669
        %1575 = vmatpush.msra.mxu0 %v668
        %1576 = vmatpush.msra.mxu0 %v667
        %1577 = vmatpush.msra.mxu0 %v666
        %1578 = vmatpush.msra.mxu0 %v665
        %1579 = vmatpush.msra.mxu0 %v664
        %1580 = vmatpush.msra.mxu0 %v663
        %1581 = vmatpush.msra.mxu0 %v662
        %1582 = vmatmul.f32.gmra.mxu0 %v763
        %v1583 = vpop.f32.mrf.mxu0
        %v1584 = vadd.f32 0.0, %v1583
        %1585 = vdwg.mxu0
        %v1587 = vsel %vm1004, %v1364, 0
        %v1590 = vsel %vm1004, %v1444, 0
        %1592 = vmatpush.xpose.msra.mxu0 0.0
        %1593 = vmatpush.xpose.msra.mxu0 0.0
        %1594 = vmatpush.xpose.msra.mxu0 0.0
        %1595 = vmatpush.xpose.msra.mxu0 0.0
        %1596 = vmatpush.xpose.msra.mxu0 0.0
        %1597 = vmatpush.xpose.msra.mxu0 0.0
        %1598 = vmatpush.xpose.msra.mxu0 0.0
        %1599 = vmatpush.xpose.msra.mxu0 0.0
        %1600 = vmatpush.xpose.msra.mxu0 0.0
        %1601 = vmatpush.xpose.msra.mxu0 0.0
        %1602 = vmatpush.xpose.msra.mxu0 0.0
        %1603 = vmatpush.xpose.msra.mxu0 0.0
        %1604 = vmatpush.xpose.msra.mxu0 0.0
        %1605 = vmatpush.xpose.msra.mxu0 0.0
        %1606 = vmatpush.xpose.msra.mxu0 0.0
        %1607 = vmatpush.xpose.msra.mxu0 %v1590
        %1608 = vmatmul.f32.gmra.mxu0 %v1587
        %v1609 = vpop.f32.mrf.mxu0
        %v1610 = vadd.f32 0.0, %v1609
        %1611 = vdwg.mxu0
        %v1613 = vsel %vm1004, %v1384, 0
        %v1616 = vsel %vm1004, %v1464, 0
        %1618 = vmatpush.xpose.msra.mxu0 0.0
        %1619 = vmatpush.xpose.msra.mxu0 0.0
        %1620 = vmatpush.xpose.msra.mxu0 0.0
        %1621 = vmatpush.xpose.msra.mxu0 0.0
        %1622 = vmatpush.xpose.msra.mxu0 0.0
        %1623 = vmatpush.xpose.msra.mxu0 0.0
        %1624 = vmatpush.xpose.msra.mxu0 0.0
        %1625 = vmatpush.xpose.msra.mxu0 0.0
        %1626 = vmatpush.xpose.msra.mxu0 0.0
        %1627 = vmatpush.xpose.msra.mxu0 0.0
        %1628 = vmatpush.xpose.msra.mxu0 0.0
        %1629 = vmatpush.xpose.msra.mxu0 0.0
        %1630 = vmatpush.xpose.msra.mxu0 0.0
        %1631 = vmatpush.xpose.msra.mxu0 0.0
        %1632 = vmatpush.xpose.msra.mxu0 0.0
        %1633 = vmatpush.xpose.msra.mxu0 %v1616
        %1634 = vmatmul.f32.gmra.mxu0 %v1613
        %v1635 = vpop.f32.mrf.mxu0
        %v1636 = vadd.f32 0.0, %v1635
        %1637 = vdwg.mxu0
        %v1639 = vsel %vm1004, %v1404, 0
        %v1642 = vsel %vm1004, %v1484, 0
        %1644 = vmatpush.xpose.msra.mxu0 0.0
        %1645 = vmatpush.xpose.msra.mxu0 0.0
        %1646 = vmatpush.xpose.msra.mxu0 0.0
        %1647 = vmatpush.xpose.msra.mxu0 0.0
        %1648 = vmatpush.xpose.msra.mxu0 0.0
        %1649 = vmatpush.xpose.msra.mxu0 0.0
        %1650 = vmatpush.xpose.msra.mxu0 0.0
        %1651 = vmatpush.xpose.msra.mxu0 0.0
        %1652 = vmatpush.xpose.msra.mxu0 0.0
        %1653 = vmatpush.xpose.msra.mxu0 0.0
        %1654 = vmatpush.xpose.msra.mxu0 0.0
        %1655 = vmatpush.xpose.msra.mxu0 0.0
        %1656 = vmatpush.xpose.msra.mxu0 0.0
        %1657 = vmatpush.xpose.msra.mxu0 0.0
        %1658 = vmatpush.xpose.msra.mxu0 0.0
        %1659 = vmatpush.xpose.msra.mxu0 %v1642
        %1660 = vmatmul.f32.gmra.mxu0 %v1639
        %v1661 = vpop.f32.mrf.mxu0
        %v1662 = vadd.f32 0.0, %v1661
        %1663 = vdwg.mxu0
        %v1665 = vsel %vm1004, %v1424, 0
        %v1668 = vsel %vm1004, %v1504, 0
        %1670 = vmatpush.xpose.msra.mxu0 0.0
        %1671 = vmatpush.xpose.msra.mxu0 0.0
        %1672 = vmatpush.xpose.msra.mxu0 0.0
        %1673 = vmatpush.xpose.msra.mxu0 0.0
        %1674 = vmatpush.xpose.msra.mxu0 0.0
        %1675 = vmatpush.xpose.msra.mxu0 0.0
        %1676 = vmatpush.xpose.msra.mxu0 0.0
        %1677 = vmatpush.xpose.msra.mxu0 0.0
        %1678 = vmatpush.xpose.msra.mxu0 0.0
        %1679 = vmatpush.xpose.msra.mxu0 0.0
        %1680 = vmatpush.xpose.msra.mxu0 0.0
        %1681 = vmatpush.xpose.msra.mxu0 0.0
        %1682 = vmatpush.xpose.msra.mxu0 0.0
        %1683 = vmatpush.xpose.msra.mxu0 0.0
        %1684 = vmatpush.xpose.msra.mxu0 0.0
        %1685 = vmatpush.xpose.msra.mxu0 %v1668
        %1686 = vmatmul.f32.gmra.mxu0 %v1665
        %v1687 = vpop.f32.mrf.mxu0
        %v1688 = vadd.f32 0.0, %v1687
        %1689 = vdwg.mxu0
        %v1690 = vmul.f32 %v1610, 0.17677669
        %v1691 = vmul.f32 %v1636, 0.17677669
        %v1692 = vmul.f32 %v1662, 0.17677669
        %v1693 = vmul.f32 %v1688, 0.17677669
        %v1694 = vsel %vm1113, %v1690, -inf
        %1695 = vmax.xlane.f32.xlu0 %v1694
        %v1696 = vpop.xlane.xlu0 %1695
        %v1697 = vsel %vm1113, %v1691, -inf
        %1698 = vmax.xlane.f32.xlu0 %v1697
        %v1699 = vpop.xlane.xlu0 %1698
        %v1700 = vsel %vm1113, %v1692, -inf
        %1701 = vmax.xlane.f32.xlu0 %v1700
        %v1702 = vpop.xlane.xlu0 %1701
        %v1703 = vsel %vm1113, %v1693, -inf
        %1704 = vmax.xlane.f32.xlu0 %v1703
        %v1705 = vpop.xlane.xlu0 %1704
        %v1706 = vsub.f32 %v1690, %v1696
        %v1707 = vsub.f32 %v1691, %v1699
        %v1708 = vsub.f32 %v1692, %v1702
        %v1709 = vsub.f32 %v1693, %v1705
        %v1710 = vmul.f32 %v1706, 1.442695
        %v1711 = vpow.pop %v1710
        %v1712 = vmul.f32 %v1707, 1.442695
        %v1713 = vpow.pop %v1712
        %v1714 = vmul.f32 %v1708, 1.442695
        %v1715 = vpow.pop %v1714
        %v1716 = vmul.f32 %v1709, 1.442695
        %v1717 = vpow.pop %v1716
        %v1718 = vsel %vm1113, %v1711, 0.0
        %1719 = vadd.xlane.f32.xlu0 %v1718
        %v1720 = vpop.xlane.xlu0 %1719
        %v1721 = vsel %vm1113, %v1713, 0.0
        %1722 = vadd.xlane.f32.xlu0 %v1721
        %v1723 = vpop.xlane.xlu0 %1722
        %v1724 = vsel %vm1113, %v1715, 0.0
        %1725 = vadd.xlane.f32.xlu0 %v1724
        %v1726 = vpop.xlane.xlu0 %1725
        %v1727 = vsel %vm1113, %v1717, 0.0
        %1728 = vadd.xlane.f32.xlu0 %v1727
        %v1729 = vpop.xlane.xlu0 %1728
        %v1730 = vrcp.pop %v1720
        %v1731 = vrcp.pop %v1723
        %v1732 = vrcp.pop %v1726
        %v1733 = vrcp.pop %v1729
        %v1734 = vmul.f32 %v1711, %v1730
        %v1735 = vmul.f32 %v1713, %v1731
        %v1736 = vmul.f32 %v1715, %v1732
        %v1737 = vmul.f32 %v1717, %v1733
        %v1739 = vsel %vm1113, %v1734, 0
        %1741 = vmatpush.msra.mxu0 0.0
        %1742 = vmatpush.msra.mxu0 0.0
        %1743 = vmatpush.msra.mxu0 0.0
        %1744 = vmatpush.msra.mxu0 0.0
        %1745 = vmatpush.msra.mxu0 0.0
        %1746 = vmatpush.msra.mxu0 0.0
        %1747 = vmatpush.msra.mxu0 0.0
        %1748 = vmatpush.msra.mxu0 0.0
        %1749 = vmatpush.msra.mxu0 0.0
        %1750 = vmatpush.msra.mxu0 0.0
        %1751 = vmatpush.msra.mxu0 0.0
        %1752 = vmatpush.msra.mxu0 0.0
        %1753 = vmatpush.msra.mxu0 0.0
        %1754 = vmatpush.msra.mxu0 0.0
        %1755 = vmatpush.msra.mxu0 0.0
        %1756 = vmatpush.msra.mxu0 %v1524
        %1757 = vmatmul.f32.gmra.mxu0 %v1739
        %v1758 = vpop.f32.mrf.mxu0
        %v1759 = vadd.f32 0.0, %v1758
        %1760 = vdwg.mxu0
        %v1762 = vsel %vm1113, %v1735, 0
        %1764 = vmatpush.msra.mxu0 0.0
        %1765 = vmatpush.msra.mxu0 0.0
        %1766 = vmatpush.msra.mxu0 0.0
        %1767 = vmatpush.msra.mxu0 0.0
        %1768 = vmatpush.msra.mxu0 0.0
        %1769 = vmatpush.msra.mxu0 0.0
        %1770 = vmatpush.msra.mxu0 0.0
        %1771 = vmatpush.msra.mxu0 0.0
        %1772 = vmatpush.msra.mxu0 0.0
        %1773 = vmatpush.msra.mxu0 0.0
        %1774 = vmatpush.msra.mxu0 0.0
        %1775 = vmatpush.msra.mxu0 0.0
        %1776 = vmatpush.msra.mxu0 0.0
        %1777 = vmatpush.msra.mxu0 0.0
        %1778 = vmatpush.msra.mxu0 0.0
        %1779 = vmatpush.msra.mxu0 %v1544
        %1780 = vmatmul.f32.gmra.mxu0 %v1762
        %v1781 = vpop.f32.mrf.mxu0
        %v1782 = vadd.f32 0.0, %v1781
        %1783 = vdwg.mxu0
        %v1785 = vsel %vm1113, %v1736, 0
        %1787 = vmatpush.msra.mxu0 0.0
        %1788 = vmatpush.msra.mxu0 0.0
        %1789 = vmatpush.msra.mxu0 0.0
        %1790 = vmatpush.msra.mxu0 0.0
        %1791 = vmatpush.msra.mxu0 0.0
        %1792 = vmatpush.msra.mxu0 0.0
        %1793 = vmatpush.msra.mxu0 0.0
        %1794 = vmatpush.msra.mxu0 0.0
        %1795 = vmatpush.msra.mxu0 0.0
        %1796 = vmatpush.msra.mxu0 0.0
        %1797 = vmatpush.msra.mxu0 0.0
        %1798 = vmatpush.msra.mxu0 0.0
        %1799 = vmatpush.msra.mxu0 0.0
        %1800 = vmatpush.msra.mxu0 0.0
        %1801 = vmatpush.msra.mxu0 0.0
        %1802 = vmatpush.msra.mxu0 %v1564
        %1803 = vmatmul.f32.gmra.mxu0 %v1785
        %v1804 = vpop.f32.mrf.mxu0
        %v1805 = vadd.f32 0.0, %v1804
        %1806 = vdwg.mxu0
        %v1808 = vsel %vm1113, %v1737, 0
        %1810 = vmatpush.msra.mxu0 0.0
        %1811 = vmatpush.msra.mxu0 0.0
        %1812 = vmatpush.msra.mxu0 0.0
        %1813 = vmatpush.msra.mxu0 0.0
        %1814 = vmatpush.msra.mxu0 0.0
        %1815 = vmatpush.msra.mxu0 0.0
        %1816 = vmatpush.msra.mxu0 0.0
        %1817 = vmatpush.msra.mxu0 0.0
        %1818 = vmatpush.msra.mxu0 0.0
        %1819 = vmatpush.msra.mxu0 0.0
        %1820 = vmatpush.msra.mxu0 0.0
        %1821 = vmatpush.msra.mxu0 0.0
        %1822 = vmatpush.msra.mxu0 0.0
        %1823 = vmatpush.msra.mxu0 0.0
        %1824 = vmatpush.msra.mxu0 0.0
        %1825 = vmatpush.msra.mxu0 %v1584
        %1826 = vmatmul.f32.gmra.mxu0 %v1808
        %v1827 = vpop.f32.mrf.mxu0
        %v1828 = vadd.f32 0.0, %v1827
        %1829 = vdwg.mxu0
        %v1831 = vsel %vm1004, %v1759, 0
        %1833 = vmatpush.msra.mxu0 0.0
        %1834 = vmatpush.msra.mxu0 0.0
        %1835 = vmatpush.msra.mxu0 0.0
        %1836 = vmatpush.msra.mxu0 0.0
        %1837 = vmatpush.msra.mxu0 0.0
        %1838 = vmatpush.msra.mxu0 0.0
        %1839 = vmatpush.msra.mxu0 0.0
        %1840 = vmatpush.msra.mxu0 0.0
        %1841 = vmatpush.msra.mxu0 0.0
        %1842 = vmatpush.msra.mxu0 0.0
        %1843 = vmatpush.msra.mxu0 0.0
        %1844 = vmatpush.msra.mxu0 0.0
        %1845 = vmatpush.msra.mxu0 %v681
        %1846 = vmatpush.msra.mxu0 %v680
        %1847 = vmatpush.msra.mxu0 %v679
        %1848 = vmatpush.msra.mxu0 %v678
        %1849 = vmatmul.f32.gmra.mxu0 %v1831
        %v1850 = vpop.f32.mrf.mxu0
        %v1851 = vadd.f32 0.0, %v1850
        %1852 = vdwg.mxu0
        %v1854 = vsel %vm1004, %v1782, 0
        %1856 = vmatpush.msra.mxu0 0.0
        %1857 = vmatpush.msra.mxu0 0.0
        %1858 = vmatpush.msra.mxu0 0.0
        %1859 = vmatpush.msra.mxu0 0.0
        %1860 = vmatpush.msra.mxu0 0.0
        %1861 = vmatpush.msra.mxu0 0.0
        %1862 = vmatpush.msra.mxu0 0.0
        %1863 = vmatpush.msra.mxu0 0.0
        %1864 = vmatpush.msra.mxu0 0.0
        %1865 = vmatpush.msra.mxu0 0.0
        %1866 = vmatpush.msra.mxu0 0.0
        %1867 = vmatpush.msra.mxu0 0.0
        %1868 = vmatpush.msra.mxu0 %v685
        %1869 = vmatpush.msra.mxu0 %v684
        %1870 = vmatpush.msra.mxu0 %v683
        %1871 = vmatpush.msra.mxu0 %v682
        %1872 = vmatmul.f32.gmra.mxu0 %v1854
        %v1873 = vpop.f32.mrf.mxu0
        %v1874 = vadd.f32 0.0, %v1873
        %1875 = vdwg.mxu0
        %v1877 = vsel %vm1004, %v1805, 0
        %1879 = vmatpush.msra.mxu0 0.0
        %1880 = vmatpush.msra.mxu0 0.0
        %1881 = vmatpush.msra.mxu0 0.0
        %1882 = vmatpush.msra.mxu0 0.0
        %1883 = vmatpush.msra.mxu0 0.0
        %1884 = vmatpush.msra.mxu0 0.0
        %1885 = vmatpush.msra.mxu0 0.0
        %1886 = vmatpush.msra.mxu0 0.0
        %1887 = vmatpush.msra.mxu0 0.0
        %1888 = vmatpush.msra.mxu0 0.0
        %1889 = vmatpush.msra.mxu0 0.0
        %1890 = vmatpush.msra.mxu0 0.0
        %1891 = vmatpush.msra.mxu0 %v689
        %1892 = vmatpush.msra.mxu0 %v688
        %1893 = vmatpush.msra.mxu0 %v687
        %1894 = vmatpush.msra.mxu0 %v686
        %1895 = vmatmul.f32.gmra.mxu0 %v1877
        %v1896 = vpop.f32.mrf.mxu0
        %v1897 = vadd.f32 0.0, %v1896
        %1898 = vdwg.mxu0
        %v1900 = vsel %vm1004, %v1828, 0
        %1902 = vmatpush.msra.mxu0 0.0
        %1903 = vmatpush.msra.mxu0 0.0
        %1904 = vmatpush.msra.mxu0 0.0
        %1905 = vmatpush.msra.mxu0 0.0
        %1906 = vmatpush.msra.mxu0 0.0
        %1907 = vmatpush.msra.mxu0 0.0
        %1908 = vmatpush.msra.mxu0 0.0
        %1909 = vmatpush.msra.mxu0 0.0
        %1910 = vmatpush.msra.mxu0 0.0
        %1911 = vmatpush.msra.mxu0 0.0
        %1912 = vmatpush.msra.mxu0 0.0
        %1913 = vmatpush.msra.mxu0 0.0
        %1914 = vmatpush.msra.mxu0 %v693
        %1915 = vmatpush.msra.mxu0 %v692
        %1916 = vmatpush.msra.mxu0 %v691
        %1917 = vmatpush.msra.mxu0 %v690
        %1918 = vmatmul.f32.gmra.mxu0 %v1900
        %v1919 = vpop.f32.mrf.mxu0
        %v1920 = vadd.f32 0.0, %v1919
        %1921 = vdwg.mxu0
        %v1922 = vadd.f32 %v1851, %v1874
        %v1923 = vadd.f32 %v1922, %v1897
        %v1924 = vadd.f32 %v1923, %v1920
        %v1925 = vadd.f32 %v763, %v1924
        %1926 = vadd.xlane.f32.xlu0 %v1345
        %v1927 = vpop.xlane.xlu0 %1926
        %1928 = vadd.xlane.f32.xlu0 %v1925
        %v1929 = vpop.xlane.xlu0 %1928
        %v1930 = vrcp.pop 128.0
        %v1931 = vmul.f32 128.0, %v1930
        %v1932 = vsub.f32 1.0, %v1931
        %v1933 = vmul.f32 %v1930, %v1932
        %v1934 = vadd.f32 %v1930, %v1933
        %vm1935 = vweird.f32 %v1930
        %v1936 = vsel %vm1935, %v1930, %v1934
        %v1937 = vmul.f32 %v1927, %v1936
        %v1938 = vmul.f32 %v1929, %v1936
        %v1939 = vsub.f32 %v1345, %v1937
        %v1940 = vsub.f32 %v1925, %v1938
        %v1941 = vmul.f32 %v1939, %v1939
        %v1942 = vmul.f32 %v1940, %v1940
        %1943 = vadd.xlane.f32.xlu0 %v1941
        %v1944 = vpop.xlane.xlu0 %1943
        %1945 = vadd.xlane.f32.xlu0 %v1942
        %v1946 = vpop.xlane.xlu0 %1945
        %v1947 = vmul.f32 %v1944, %v1936
        %v1948 = vmul.f32 %v1946, %v1936
        %v1949 = vadd.f32 %v1947, 1e-05
        %v1950 = vadd.f32 %v1948, 1e-05
        %v1951 = vrsqrt.pop %v1949
        %v1952 = vmul.f32 %v1951, %v1949
        %v1953 = vmul.f32 %v1952, %v1951
        %v1954 = vmul.f32 0.5, %v1953
        %v1955 = vsub.f32 1.5, %v1954
        %v1956 = vmul.f32 %v1951, %v1955
        %vm1957 = vweird.f32 %v1949
        %vm1958 = vweird.f32 %v1951
        %vm1959 = vmor %vm1957, %vm1958
        %v1960 = vsel %vm1959, %v1951, %v1956
        %v1961 = vrsqrt.pop %v1950
        %v1962 = vmul.f32 %v1961, %v1950
        %v1963 = vmul.f32 %v1962, %v1961
        %v1964 = vmul.f32 0.5, %v1963
        %v1965 = vsub.f32 1.5, %v1964
        %v1966 = vmul.f32 %v1961, %v1965
        %vm1967 = vweird.f32 %v1950
        %vm1968 = vweird.f32 %v1961
        %vm1969 = vmor %vm1967, %vm1968
        %v1970 = vsel %vm1969, %v1961, %v1966
        %v1971 = vmul.f32 %v1939, %v1960
        %v1972 = vmul.f32 %v1940, %v1970
        %v1974 = vperm.slane %v694, 0
        %v1976 = vmul.f32 %v1971, %v1974
        %v1977 = vmul.f32 %v1972, %v1974
        %v1979 = vperm.slane %v695, 0
        %v1981 = vadd.f32 %v1976, %v1979
        %v1982 = vadd.f32 %v1977, %v1979
        %v1984 = vperm.slane %v728, 0
        %v1985 = vperm.slane %v728, 1
        %1988 = vmatpush.msra.mxu0 %v726
        %1989 = vmatpush.msra.mxu0 %v724
        %1990 = vmatpush.msra.mxu0 %v722
        %1991 = vmatpush.msra.mxu0 %v720
        %1992 = vmatpush.msra.mxu0 %v718
        %1993 = vmatpush.msra.mxu0 %v716
        %1994 = vmatpush.msra.mxu0 %v714
        %1995 = vmatpush.msra.mxu0 %v712
        %1996 = vmatpush.msra.mxu0 %v710
        %1997 = vmatpush.msra.mxu0 %v708
        %1998 = vmatpush.msra.mxu0 %v706
        %1999 = vmatpush.msra.mxu0 %v704
        %2000 = vmatpush.msra.mxu0 %v702
        %2001 = vmatpush.msra.mxu0 %v700
        %2002 = vmatpush.msra.mxu0 %v698
        %2003 = vmatpush.msra.mxu0 %v696
        %2004 = vmatmul.f32.gmra.mxu0 %v1981
        %v2005 = vpop.f32.mrf.mxu0
        %v2006 = vadd.f32 %v1984, %v2005
        %2007 = vmatmul.f32.gmra.mxu0 %v1982
        %v2008 = vpop.f32.mrf.mxu0
        %v2009 = vadd.f32 %v1984, %v2008
        %2010 = vdwg.mxu0
        %2011 = vmatpush.msra.mxu0 %v727
        %2012 = vmatpush.msra.mxu0 %v725
        %2013 = vmatpush.msra.mxu0 %v723
        %2014 = vmatpush.msra.mxu0 %v721
        %2015 = vmatpush.msra.mxu0 %v719
        %2016 = vmatpush.msra.mxu0 %v717
        %2017 = vmatpush.msra.mxu0 %v715
        %2018 = vmatpush.msra.mxu0 %v713
        %2019 = vmatpush.msra.mxu0 %v711
        %2020 = vmatpush.msra.mxu0 %v709
        %2021 = vmatpush.msra.mxu0 %v707
        %2022 = vmatpush.msra.mxu0 %v705
        %2023 = vmatpush.msra.mxu0 %v703
        %2024 = vmatpush.msra.mxu0 %v701
        %2025 = vmatpush.msra.mxu0 %v699
        %2026 = vmatpush.msra.mxu0 %v697
        %2027 = vmatmul.f32.gmra.mxu0 %v1981
        %v2028 = vpop.f32.mrf.mxu0
        %v2029 = vadd.f32 %v1985, %v2028
        %2030 = vmatmul.f32.gmra.mxu0 %v1982
        %v2031 = vpop.f32.mrf.mxu0
        %v2032 = vadd.f32 %v1985, %v2031
        %2033 = vdwg.mxu0
        %v2034 = vmax.f32 %v2006, 0.0
        %v2035 = vmax.f32 %v2029, 0.0
        %v2036 = vmax.f32 %v2009, 0.0
        %v2037 = vmax.f32 %v2032, 0.0
        %v2039 = vperm.slane %v761, 0
        %2041 = vmatpush.msra.mxu0 %v744
        %2042 = vmatpush.msra.mxu0 %v743
        %2043 = vmatpush.msra.mxu0 %v742
        %2044 = vmatpush.msra.mxu0 %v741
        %2045 = vmatpush.msra.mxu0 %v740
        %2046 = vmatpush.msra.mxu0 %v739
        %2047 = vmatpush.msra.mxu0 %v738
        %2048 = vmatpush.msra.mxu0 %v737
        %2049 = vmatpush.msra.mxu0 %v736
        %2050 = vmatpush.msra.mxu0 %v735
        %2051 = vmatpush.msra.mxu0 %v734
        %2052 = vmatpush.msra.mxu0 %v733
        %2053 = vmatpush.msra.mxu0 %v732
        %2054 = vmatpush.msra.mxu0 %v731
        %2055 = vmatpush.msra.mxu0 %v730
        %2056 = vmatpush.msra.mxu0 %v729
        %2057 = vmatmul.f32.gmra.mxu0 %v2034
        %v2058 = vpop.f32.mrf.mxu0
        %v2059 = vadd.f32 %v2039, %v2058
        %2060 = vmatmul.f32.gmra.mxu0 %v2036
        %v2061 = vpop.f32.mrf.mxu0
        %v2062 = vadd.f32 %v2039, %v2061
        %2063 = vdwg.mxu0
        %2064 = vmatpush.msra.mxu0 %v760
        %2065 = vmatpush.msra.mxu0 %v759
        %2066 = vmatpush.msra.mxu0 %v758
        %2067 = vmatpush.msra.mxu0 %v757
        %2068 = vmatpush.msra.mxu0 %v756
        %2069 = vmatpush.msra.mxu0 %v755
        %2070 = vmatpush.msra.mxu0 %v754
        %2071 = vmatpush.msra.mxu0 %v753
        %2072 = vmatpush.msra.mxu0 %v752
        %2073 = vmatpush.msra.mxu0 %v751
        %2074 = vmatpush.msra.mxu0 %v750
        %2075 = vmatpush.msra.mxu0 %v749
        %2076 = vmatpush.msra.mxu0 %v748
        %2077 = vmatpush.msra.mxu0 %v747
        %2078 = vmatpush.msra.mxu0 %v746
        %2079 = vmatpush.msra.mxu0 %v745
        %2080 = vmatmul.f32.gmra.mxu0 %v2035
        %v2081 = vpop.f32.mrf.mxu0
        %v2082 = vadd.f32 %v2059, %v2081
        %2083 = vmatmul.f32.gmra.mxu0 %v2037
        %v2084 = vpop.f32.mrf.mxu0
        %v2085 = vadd.f32 %v2062, %v2084
        %2086 = vdwg.mxu0
        %v2087 = vadd.f32 %v1981, %v2082
        %v2088 = vadd.f32 %v1982, %v2085
        %2089 = vadd.xlane.f32.xlu0 %v2087
        %v2090 = vpop.xlane.xlu0 %2089
        %2091 = vadd.xlane.f32.xlu0 %v2088
        %v2092 = vpop.xlane.xlu0 %2091
        %v2093 = vmul.f32 %v2090, %v1936
        %v2094 = vmul.f32 %v2092, %v1936
        %v2095 = vsub.f32 %v2087, %v2093
        %v2096 = vsub.f32 %v2088, %v2094
        %v2097 = vmul.f32 %v2095, %v2095
        %v2098 = vmul.f32 %v2096, %v2096
        %2099 = vadd.xlane.f32.xlu0 %v2097
        %v2100 = vpop.xlane.xlu0 %2099
        %2101 = vadd.xlane.f32.xlu0 %v2098
        %v2102 = vpop.xlane.xlu0 %2101
        %v2103 = vmul.f32 %v2100, %v1936
        %v2104 = vmul.f32 %v2102, %v1936
        %v2105 = vadd.f32 %v2103, 1e-05
        %v2106 = vadd.f32 %v2104, 1e-05
        %v2107 = vrsqrt.pop %v2105
        %v2108 = vmul.f32 %v2107, %v2105
        %v2109 = vmul.f32 %v2108, %v2107
        %v2110 = vmul.f32 0.5, %v2109
        %v2111 = vsub.f32 1.5, %v2110
        %v2112 = vmul.f32 %v2107, %v2111
        %vm2113 = vweird.f32 %v2105
        %vm2114 = vweird.f32 %v2107
        %vm2115 = vmor %vm2113, %vm2114
        %v2116 = vsel %vm2115, %v2107, %v2112
        %v2117 = vrsqrt.pop %v2106
        %v2118 = vmul.f32 %v2117, %v2106
        %v2119 = vmul.f32 %v2118, %v2117
        %v2120 = vmul.f32 0.5, %v2119
        %v2121 = vsub.f32 1.5, %v2120
        %v2122 = vmul.f32 %v2117, %v2121
        %vm2123 = vweird.f32 %v2106
        %vm2124 = vweird.f32 %v2117
        %vm2125 = vmor %vm2123, %vm2124
        %v2126 = vsel %vm2125, %v2117, %v2122
        %v2127 = vmul.f32 %v2095, %v2116
        %v2128 = vmul.f32 %v2096, %v2126
        %v2129 = vmul.f32 %v2127, %v1974
        %v2130 = vmul.f32 %v2128, %v1974
        %v2131 = vadd.f32 %v2129, %v1979
        %v2132 = vadd.f32 %v2130, %v1979
        %2133 = vst [vmem:[#allocation2] sm:$0xff] %v2131
        %2134 = vst [vmem:[#allocation2 + $0x8] sm:$0xff] %v2132
        %2135 = vst [vmem:[#allocation3] sm:$0xff] %v2131
        %2136 = vst [vmem:[#allocation3 + $0x8] sm:$0xff] %v2132
        // Predicated region
        $region61: #{tpu_custom_call.1} parent=55 // pred_check
          %p2137 = pneg %p285
        $region62: #{tpu_custom_call.1} parent=55 // pred_check_branch
          %2139 = sbr.rel (%p2137) target = $region64
        $region63: #{tpu_custom_call.1} parent=55 // pred_region
          %s2140 = smul.u32 2, %s25
          %2142 = vsyncadd [#allocation4], 0
          %s2143 = smul.addr %s2140, 8
          %s2144 = scalar_lea.hbm %s9, %s2143
          %s2145 = sshll.u32 [#allocation3], 4
          %s2146 = int_to_ptr.vmem [resolvable:$true] %s2145
          %s2147 = sshll.u32 %s2144, 4
          %s2148 = int_to_ptr.hbm [resolvable:$true] %s2147
          %2153 = dma.vmem_to_hbm [thread:$0]  %s2146, 256, %s2148, [#allocation4], 128, 128, 8
        $region64: #{tpu_custom_call.1} parent=55 // pred_fallthru
          _
        // Predicated region
        $region65: #{tpu_custom_call.1} parent=55 // pred_check
          %p2154 = pneg %p285
        $region66: #{tpu_custom_call.1} parent=55 // pred_check_branch
          %2156 = sbr.rel (%p2154) target = $region68
        $region67: #{tpu_custom_call.1} parent=55 // pred_region
          %2158 = dma.done [#allocation4], 256
        $region68: #{tpu_custom_call.1} parent=55 // pred_fallthru
          _
      $region56: #{tpu_custom_call.1} parent=5 // pred_fallthru
        _
      %p2159 = scmp.le.s32.totalorder 2, %s16
      // Predicated region
      $region69: #{tpu_custom_call.1} parent=5 // pred_check
        %p2160 = pneg %p2159
      $region70: #{tpu_custom_call.1} parent=5 // pred_check_branch
        %2162 = sbr.rel (%p2160) target = $region72
      $region71: #{tpu_custom_call.1} parent=5 // pred_region
        %s2163 = ssub.s32 %s16, 2
      $region72: #{tpu_custom_call.1} parent=5 // pred_fallthru
        _
    $region6: #{tpu_custom_call.1} parent=1 // loop_footer
      %s20 = sadd.s32 1, %s16
    $region7: #{tpu_custom_call.1} parent=1 // loop_footer_branch
      %15 = sbr.rel target = $region3
    $region8: #{tpu_custom_call.1} parent=1 // loop_exit
      _
    %2164 = vsyncpa [#allocation4], 1
    %s2165 = scalar_lea.sflag [#allocation4], 1
    %2166 = vsyncpa %s2165, 1

</llo_original>
